<compile_context>
chip_gen: v6e
topology: v6e:2x2x1
jax: 0.10.0
libtpu: 0.0.40
codegen_flags: <defaults>
</compile_context>

<pallas_src>
import functools

import jax
import jax.numpy as jnp
import numpy as np
from jax import lax
from jax.experimental import pallas as pl
from jax.experimental.pallas import tpu as pltpu

_BF16 = jnp.bfloat16
_MIB = 1024 * 1024


# ---------------------------------------------------------------------------
# Per-generation VMEM budgets.
# ---------------------------------------------------------------------------
@functools.lru_cache(maxsize=None)
def _vmem_budgets():
    """(scoped vmem limit, adj stream budget) derived from chip VMEM size."""
    try:
        cap = getattr(pltpu.get_tpu_info(), "vmem_capacity_bytes", 64 * _MIB)
    except Exception:  # interpret mode / unknown chip -> conservative default
        cap = 64 * _MIB
    if cap <= 64 * _MIB:              # v7x: 64 MiB per TensorCore
        return 40 * _MIB, 24 * _MIB
    return 96 * _MIB, 64 * _MIB       # v5e / v6e: 128 MiB


def _round_down(v, step):
    return max(step, (v // step) * step)


def _largest_divisor_tile(n, max_tile, step):
    """Largest multiple of `step` that is <= max_tile and divides n; else n."""
    t = (min(max_tile, n) // step) * step
    while t >= step:
        if n % t == 0:
            return t
        t -= step
    return n  # only reachable for tiny/unpadded n; full extent is legal


def _pick_row_tile(n, row_bytes, *, cap=1024, min_steps=4):
    """Row tile: double-buffered (row_tile, row) blocks fit the stream budget,
    and the grid gets >= min_steps steps so megacore (v7x) has work."""
    _, stream_budget = _vmem_budgets()
    max_rows = max(8, min(cap, n, stream_budget // max(1, 2 * row_bytes)))
    if n >= 8 * min_steps:
        max_rows = min(max_rows, _round_down(n // min_steps, 8))
    return _largest_divisor_tile(n, max_rows, 8)


def _pad_to_multiple(a, axes, multiple):
    widths = [(0, 0)] * a.ndim
    changed = False
    for ax in axes:
        pad = (-a.shape[ax]) % multiple
        if pad:
            widths[ax] = (0, pad)
            changed = True
    return jnp.pad(a, widths) if changed else a


def _sigmoid_f32(x):
    # sigmoid(x) = 0.5 * (1 + tanh(x/2)): one EUP transcendental per element
    # (vs exp + reciprocal); mul/add ride the free VALU slots.  f32 math is
    # correct & fast on all of v5e/v6e/v7x.
    return 0.5 * (1.0 + jnp.tanh(0.5 * x))


# ---------------------------------------------------------------------------
# Kernel 1 (general path): feature transform  XW1 = X @ W1.
# ---------------------------------------------------------------------------
def _feature_transform_kernel(x_ref, w_ref, xw_ref):
    xw_ref[...] = jnp.dot(
        x_ref[...], w_ref[...], preferred_element_type=jnp.float32
    ).astype(xw_ref.dtype)


def feature_transform(x, w):
    n, in_dim = x.shape
    out_dim = w.shape[1]
    vmem_limit, _ = _vmem_budgets()
    row_tile = _pick_row_tile(n, in_dim * x.dtype.itemsize)
    return pl.pallas_call(
        _feature_transform_kernel,
        out_shape=jax.ShapeDtypeStruct((n, out_dim), _BF16),
        grid_spec=pltpu.PrefetchScalarGridSpec(
            num_scalar_prefetch=0,
            grid=(n // row_tile,),
            in_specs=[
                pl.BlockSpec((row_tile, in_dim), lambda i: (i, 0)),  # streamed
                pl.BlockSpec((in_dim, out_dim), lambda i: (0, 0)),   # resident
            ],
            out_specs=pl.BlockSpec((row_tile, out_dim), lambda i: (i, 0)),
        ),
        compiler_params=pltpu.CompilerParams(
            dimension_semantics=("parallel",),
            vmem_limit_bytes=vmem_limit,
        ),
        cost_estimate=pl.CostEstimate(
            flops=2 * n * in_dim * out_dim,
            transcendentals=0,
            bytes_accessed=n * in_dim * x.dtype.itemsize
            + in_dim * out_dim * w.dtype.itemsize
            + n * out_dim * 2,
        ),
    )(x, w)


# ---------------------------------------------------------------------------
# Kernel 2 (general path): first GCN layer fused with the 2nd feature
# transform:  HW2 = relu(adj @ XW1) @ W2.   adj streamed (row_tile, N) bf16,
# XW1 / W2 resident; `hidden` never touches HBM.
# ---------------------------------------------------------------------------
def _gcn1_fused_kernel(adj_ref, xw1_ref, w2_ref, hw2_ref):
    h = jnp.maximum(
        jnp.dot(adj_ref[...], xw1_ref[...], preferred_element_type=jnp.float32),
        0.0,
    )
    hw2_ref[...] = jnp.dot(
        h.astype(_BF16), w2_ref[...], preferred_element_type=jnp.float32
    ).astype(hw2_ref.dtype)


def gcn1_fused(adj, xw1, w2):
    n = adj.shape[0]
    h1 = xw1.shape[1]
    h2 = w2.shape[1]
    vmem_limit, _ = _vmem_budgets()
    row_tile = _pick_row_tile(n, n * adj.dtype.itemsize)
    return pl.pallas_call(
        _gcn1_fused_kernel,
        out_shape=jax.ShapeDtypeStruct((n, h2), _BF16),
        grid_spec=pltpu.PrefetchScalarGridSpec(
            num_scalar_prefetch=0,
            grid=(n // row_tile,),
            in_specs=[
                pl.BlockSpec((row_tile, n), lambda i: (i, 0)),  # streamed adj
                pl.BlockSpec((n, h1), lambda i: (0, 0)),        # resident XW1
                pl.BlockSpec((h1, h2), lambda i: (0, 0)),       # resident W2
            ],
            out_specs=pl.BlockSpec((row_tile, h2), lambda i: (i, 0)),
        ),
        compiler_params=pltpu.CompilerParams(
            dimension_semantics=("parallel",),
            vmem_limit_bytes=vmem_limit,
        ),
        cost_estimate=pl.CostEstimate(
            flops=2 * n * n * h1 + 2 * n * h1 * h2,
            transcendentals=0,
            bytes_accessed=n * n * adj.dtype.itemsize
            + n * h1 * xw1.dtype.itemsize
            + h1 * h2 * w2.dtype.itemsize
            + n * h2 * 2,
        ),
    )(adj, xw1, w2)


# ---------------------------------------------------------------------------
# Kernel 3 (general path): second aggregation  Z = adj @ HW2 (identity act.).
# ---------------------------------------------------------------------------
def _aggregate_kernel(adj_ref, m_ref, out_ref):
    out_ref[...] = jnp.dot(
        adj_ref[...], m_ref[...], preferred_element_type=jnp.float32
    ).astype(out_ref.dtype)


def graph_aggregate(adj, m):
    n = adj.shape[0]
    out_dim = m.shape[1]
    vmem_limit, _ = _vmem_budgets()
    row_tile = _pick_row_tile(n, n * adj.dtype.itemsize)
    return pl.pallas_call(
        _aggregate_kernel,
        out_shape=jax.ShapeDtypeStruct((n, out_dim), _BF16),
        grid_spec=pltpu.PrefetchScalarGridSpec(
            num_scalar_prefetch=0,
            grid=(n // row_tile,),
            in_specs=[
                pl.BlockSpec((row_tile, n), lambda i: (i, 0)),   # streamed adj
                pl.BlockSpec((n, out_dim), lambda i: (0, 0)),    # resident HW2
            ],
            out_specs=pl.BlockSpec((row_tile, out_dim), lambda i: (i, 0)),
        ),
        compiler_params=pltpu.CompilerParams(
            dimension_semantics=("parallel",),
            vmem_limit_bytes=vmem_limit,
        ),
        cost_estimate=pl.CostEstimate(
            flops=2 * n * n * out_dim,
            transcendentals=0,
            bytes_accessed=n * n * adj.dtype.itemsize + 2 * n * out_dim * 2,
        ),
    )(adj, m)


# ---------------------------------------------------------------------------
# Kernel 4 (general path): dot-product decoder  A_pred = sigmoid(Z @ Z^T).
# Z is pre-transposed once in the wrapper; both tiles arrive via BlockSpec, so
# no in-kernel slicing/relayout.  Output tiles are large and lane-dense.
# ---------------------------------------------------------------------------
def _decode_kernel(zi_ref, ztj_ref, out_ref):
    logits = jnp.dot(zi_ref[...], ztj_ref[...], preferred_element_type=jnp.float32)
    out_ref[...] = _sigmoid_f32(logits).astype(out_ref.dtype)


def dot_product_decode(z, *, out_dtype=_BF16):
    n, d = z.shape
    vmem_limit, _ = _vmem_budgets()
    tm = _largest_divisor_tile(n, 512, 8)      # sublane tile
    tn = _largest_divisor_tile(n, 2048, 128)   # lane tile -> unmasked stores
    zt = z.T  # one-shot (d, N) transpose, outside the hot decoder grid
    return pl.pallas_call(
        _decode_kernel,
        out_shape=jax.ShapeDtypeStruct((n, n), out_dtype),
        grid_spec=pltpu.PrefetchScalarGridSpec(
            num_scalar_prefetch=0,
            grid=(n // tm, n // tn),
            in_specs=[
                pl.BlockSpec((tm, d), lambda i, j: (i, 0)),
                pl.BlockSpec((d, tn), lambda i, j: (0, j)),
            ],
            out_specs=pl.BlockSpec((tm, tn), lambda i, j: (i, j)),
        ),
        compiler_params=pltpu.CompilerParams(
            dimension_semantics=("parallel", "parallel"),
            vmem_limit_bytes=vmem_limit,
        ),
        cost_estimate=pl.CostEstimate(
            flops=2 * n * n * d,
            transcendentals=n * n,  # one tanh per output element
            bytes_accessed=2 * n * d * z.dtype.itemsize
            + n * n * jnp.dtype(out_dtype).itemsize,
        ),
    )(z, zt)


# ---------------------------------------------------------------------------
# Fully fused small-N path: the entire forward in ONE pallas_call, with adj,
# X, W1, W2 and all intermediates VMEM-resident.
# ---------------------------------------------------------------------------
def _gae_fused_kernel(x_ref, adj_ref, w1_ref, w2_ref, out_ref):
    adj = adj_ref[...]
    xw1 = jnp.dot(
        x_ref[...], w1_ref[...], preferred_element_type=jnp.float32
    ).astype(_BF16)
    h = jnp.maximum(
        jnp.dot(adj, xw1, preferred_element_type=jnp.float32), 0.0
    ).astype(_BF16)
    hw2 = jnp.dot(h, w2_ref[...], preferred_element_type=jnp.float32).astype(_BF16)
    z = jnp.dot(adj, hw2, preferred_element_type=jnp.float32).astype(_BF16)
    # Single Z Z^T contraction — the (N,16) relayout happens exactly once here.
    logits = lax.dot_general(
        z, z,
        dimension_numbers=(((1,), (1,)), ((), ())),
        preferred_element_type=jnp.float32,
    )
    out_ref[...] = _sigmoid_f32(logits).astype(out_ref.dtype)


def gae_fused(x, adj, w1, w2, *, out_dtype=_BF16):
    n, in_dim = x.shape
    h1 = w1.shape[1]
    h2 = w2.shape[1]
    vmem_limit, _ = _vmem_budgets()
    return pl.pallas_call(
        _gae_fused_kernel,
        out_shape=jax.ShapeDtypeStruct((n, n), out_dtype),
        grid_spec=pltpu.PrefetchScalarGridSpec(
            num_scalar_prefetch=0,
            grid=(1,),
            in_specs=[
                pl.BlockSpec((n, in_dim), lambda i: (0, 0)),
                pl.BlockSpec((n, n), lambda i: (0, 0)),
                pl.BlockSpec((in_dim, h1), lambda i: (0, 0)),
                pl.BlockSpec((h1, h2), lambda i: (0, 0)),
            ],
            out_specs=pl.BlockSpec((n, n), lambda i: (0, 0)),
        ),
        compiler_params=pltpu.CompilerParams(
            dimension_semantics=("arbitrary",),
            vmem_limit_bytes=vmem_limit,
        ),
        cost_estimate=pl.CostEstimate(
            flops=2 * n * (in_dim * h1 + n * h1 + h1 * h2 + n * h2 + n * h2),
            transcendentals=n * n,
            bytes_accessed=n * n * (adj.dtype.itemsize + jnp.dtype(out_dtype).itemsize)
            + n * in_dim * x.dtype.itemsize,
        ),
    )(x, adj, w1, w2)


# ---------------------------------------------------------------------------
# Full forward pass.  Callers should pass adj already cast to bf16 (cast the
# N^2 matrix once, outside the jit).
# ---------------------------------------------------------------------------
@functools.partial(jax.jit, static_argnames=("force_general",))
def gae_forward(x, adj, w1, w2, *, force_general=False):
    n = x.shape[0]
    if adj.dtype != _BF16:
        # Fallback only: prefer storing / passing adj in bf16 so this N^2 cast
        # is not paid on every call.
        adj = adj.astype(_BF16)
    x = x.astype(_BF16)
    w1 = w1.astype(_BF16)
    w2 = w2.astype(_BF16)

    # Pad the node axis to a multiple of 128 so every (8,128) tile constraint
    # is met without full-extent fallback blocks.  Zero padding is exact here
    # (padded nodes yield Z rows of 0) and the pad region is sliced off below.
    x_p = _pad_to_multiple(x, (0,), 128)
    adj_p = _pad_to_multiple(adj, (0, 1), 128)
    n_pad = x_p.shape[0]

    vmem_limit, _ = _vmem_budgets()
    # Fused path: ~2*(adj + out) bf16 + f32 logits temporaries ~= 16*N^2 bytes.
    use_fused = (16 * n_pad * n_pad <= vmem_limit) and not force_general

    if use_fused:
        a_pred = gae_fused(x_p, adj_p, w1, w2)
    else:
        xw1 = feature_transform(x_p, w1)     # X @ W1
        hw2 = gcn1_fused(adj_p, xw1, w2)     # relu(adj @ XW1) @ W2  (fused)
        z = graph_aggregate(adj_p, hw2)      # adj @ HW2
        a_pred = dot_product_decode(z)       # sigmoid(Z @ Z^T)

    return a_pred[:n, :n]


# ---------------------------------------------------------------------------
# Deterministic parameter init (glorot_init from the reference module).
# ---------------------------------------------------------------------------
def glorot_init(key, input_dim, output_dim):
    init_range = np.sqrt(6.0 / (input_dim + output_dim))
    u = jax.random.uniform(key, (input_dim, output_dim), dtype=jnp.float32)
    return u * 2.0 * init_range - init_range


if __name__ == "__main__":
    # Small, module-consistent shapes: N nodes, input_dim -> hidden1 -> hidden2.
    N, INPUT_DIM, HIDDEN1, HIDDEN2 = 256, 32, 32, 16

    key = jax.random.PRNGKey(0)
    k_x, k_adj, k_w1, k_w2 = jax.random.split(key, 4)

    x = jax.random.normal(k_x, (N, INPUT_DIM), dtype=jnp.float32)

    # Symmetric, row-normalized dense adjacency (stand-in for the sparse adj).
    a = (jax.random.uniform(k_adj, (N, N)) < 0.05).astype(jnp.float32)
    a = jnp.maximum(a, a.T) + jnp.eye(N, dtype=jnp.float32)
    adj = a / jnp.sum(a, axis=1, keepdims=True)
    # Persistent bf16 adjacency: the N^2 cast is paid exactly once, here.
    adj_bf16 = jax.block_until_ready(adj.astype(_BF16))

    w1 = glorot_init(k_w1, INPUT_DIM, HIDDEN1)
    w2 = glorot_init(k_w2, HIDDEN1, HIDDEN2)

    # Fused single-launch path (default at this N) and general streaming path.
    out_fused = jax.block_until_ready(gae_forward(x, adj_bf16, w1, w2))
    out_general = jax.block_until_ready(
        gae_forward(x, adj_bf16, w1, w2, force_general=True)
    )
    out_fused_f32 = np.asarray(out_fused.astype(jnp.float32))
    out_general_f32 = np.asarray(out_general.astype(jnp.float32))

    # Reference 1: mirrors the kernel's bf16-operand / f32-accumulate precision.
    def _ref_bf16(x, adj, w1, w2):
        b = _BF16
        adj_b, x_b, w1_b, w2_b = (t.astype(b) for t in (adj, x, w1, w2))
        xw1 = jnp.dot(x_b, w1_b, preferred_element_type=jnp.float32).astype(b)
        h = jnp.maximum(
            jnp.dot(adj_b, xw1, preferred_element_type=jnp.float32), 0.0
        ).astype(b)
        hw2 = jnp.dot(h, w2_b, preferred_element_type=jnp.float32).astype(b)
        z = jnp.dot(adj_b, hw2, preferred_element_type=jnp.float32).astype(b)
        logits = jnp.dot(z, z.T, preferred_element_type=jnp.float32)
        return jax.nn.sigmoid(logits).astype(b)

    ref_b = np.asarray(_ref_bf16(x, adj, w1, w2).astype(jnp.float32))
    np.testing.assert_allclose(out_fused_f32, ref_b, rtol=2e-2, atol=2e-2)
    np.testing.assert_allclose(out_general_f32, ref_b, rtol=2e-2, atol=2e-2)

    # Reference 2: pure-f32 module semantics (loose tolerance: intermediates
    # and A_pred are bf16 in the kernel by design).
    h_f32 = jnp.maximum(adj @ (x @ w1), 0.0)
    z_f32 = adj @ (h_f32 @ w2)
    a_f32 = np.asarray(jax.nn.sigmoid(z_f32 @ z_f32.T))
    np.testing.assert_allclose(out_fused_f32, a_f32, rtol=5e-2, atol=5e-2)
    np.testing.assert_allclose(out_general_f32, a_f32, rtol=5e-2, atol=5e-2)

    print("KERNEL_OK")
</pallas_src>

<mosaic_0001>
module attributes {stable_mosaic.version = 11 : i64} {
  func.func @_gae_fused_kernel(%arg0: i32, %arg1: memref<256x32xbf16, #tpu.memory_space<vmem>>, %arg2: memref<256x256xbf16, #tpu.memory_space<vmem>>, %arg3: memref<32x32xbf16, #tpu.memory_space<vmem>>, %arg4: memref<32x16xbf16, #tpu.memory_space<vmem>>, %arg5: memref<256x256xbf16, #tpu.memory_space<vmem>>) attributes {dimension_semantics = [#tpu.dimension_semantics<arbitrary>], iteration_bounds = array<i64: 1>, scalar_prefetch = 0 : i64, scratch_operands = 0 : i64, tpu.core_type = #tpu.core_type<tc>, window_params = [{pipeline_mode = #tpu.pipeline_mode<synchronous>, transform_indices = @transform_0, window_bounds = array<i64: 256, 32>}, {pipeline_mode = #tpu.pipeline_mode<synchronous>, transform_indices = @transform_1, window_bounds = array<i64: 256, 256>}, {pipeline_mode = #tpu.pipeline_mode<synchronous>, transform_indices = @transform_2, window_bounds = array<i64: 32, 32>}, {pipeline_mode = #tpu.pipeline_mode<synchronous>, transform_indices = @transform_3, window_bounds = array<i64: 32, 16>}, {pipeline_mode = #tpu.pipeline_mode<synchronous>, transform_indices = @transform_4, window_bounds = array<i64: 256, 256>}]} {
    %c0 = arith.constant 0 : index
    %c0_0 = arith.constant 0 : index
    %0 = vector.load %arg2[%c0, %c0_0] : memref<256x256xbf16, #tpu.memory_space<vmem>>, vector<256x256xbf16>
    %c0_1 = arith.constant 0 : index
    %c0_2 = arith.constant 0 : index
    %1 = vector.load %arg1[%c0_1, %c0_2] : memref<256x32xbf16, #tpu.memory_space<vmem>>, vector<256x32xbf16>
    %c0_3 = arith.constant 0 : index
    %c0_4 = arith.constant 0 : index
    %2 = vector.load %arg3[%c0_3, %c0_4] : memref<32x32xbf16, #tpu.memory_space<vmem>>, vector<32x32xbf16>
    %cst = arith.constant dense<0.000000e+00> : vector<256x32xf32>
    %3 = tpu.matmul %1, %2, %cst {dimension_numbers = #tpu.dot_dimension_numbers<[1], [0], [0], [1], [0, 0, 1, 1], [], []>} : vector<256x32xbf16>, vector<32x32xbf16>, vector<256x32xf32> -> vector<256x32xf32>
    %4 = arith.truncf %3 : vector<256x32xf32> to vector<256x32xbf16>
    %cst_5 = arith.constant dense<0.000000e+00> : vector<256x32xf32>
    %5 = tpu.matmul %0, %4, %cst_5 {dimension_numbers = #tpu.dot_dimension_numbers<[1], [0], [0], [1], [0, 0, 1, 1], [], []>} : vector<256x256xbf16>, vector<256x32xbf16>, vector<256x32xf32> -> vector<256x32xf32>
    %cst_6 = arith.constant 0.000000e+00 : f32
    %6 = vector.broadcast %cst_6 : f32 to vector<256x32xf32>
    %7 = arith.maximumf %5, %6 : vector<256x32xf32>
    %8 = arith.truncf %7 : vector<256x32xf32> to vector<256x32xbf16>
    %c0_7 = arith.constant 0 : index
    %c0_8 = arith.constant 0 : index
    %9 = vector.load %arg4[%c0_7, %c0_8] : memref<32x16xbf16, #tpu.memory_space<vmem>>, vector<32x16xbf16>
    %cst_9 = arith.constant dense<0.000000e+00> : vector<256x16xf32>
    %10 = tpu.matmul %8, %9, %cst_9 {dimension_numbers = #tpu.dot_dimension_numbers<[1], [0], [0], [1], [0, 0, 1, 1], [], []>} : vector<256x32xbf16>, vector<32x16xbf16>, vector<256x16xf32> -> vector<256x16xf32>
    %11 = arith.truncf %10 : vector<256x16xf32> to vector<256x16xbf16>
    %cst_10 = arith.constant dense<0.000000e+00> : vector<256x16xf32>
    %12 = tpu.matmul %0, %11, %cst_10 {dimension_numbers = #tpu.dot_dimension_numbers<[1], [0], [0], [1], [0, 0, 1, 1], [], []>} : vector<256x256xbf16>, vector<256x16xbf16>, vector<256x16xf32> -> vector<256x16xf32>
    %13 = arith.truncf %12 : vector<256x16xf32> to vector<256x16xbf16>
    %cst_11 = arith.constant dense<0.000000e+00> : vector<256x256xf32>
    %14 = tpu.matmul %13, %13, %cst_11 {dimension_numbers = #tpu.dot_dimension_numbers<[1], [1], [0], [0], [0, 0, 1, 0], [], []>} : vector<256x16xbf16>, vector<256x16xbf16>, vector<256x256xf32> -> vector<256x256xf32>
    %cst_12 = arith.constant 5.000000e-01 : f32
    %15 = vector.broadcast %cst_12 : f32 to vector<256x256xf32>
    %16 = arith.mulf %15, %14 : vector<256x256xf32>
    %17 = math.tanh %16 : vector<256x256xf32>
    %cst_13 = arith.constant 1.000000e+00 : f32
    %18 = vector.broadcast %cst_13 : f32 to vector<256x256xf32>
    %19 = arith.addf %18, %17 : vector<256x256xf32>
    %cst_14 = arith.constant 5.000000e-01 : f32
    %20 = vector.broadcast %cst_14 : f32 to vector<256x256xf32>
    %21 = arith.mulf %20, %19 : vector<256x256xf32>
    %22 = arith.truncf %21 : vector<256x256xf32> to vector<256x256xbf16>
    %c0_15 = arith.constant 0 : index
    %c0_16 = arith.constant 0 : index
    %23 = vector.load %arg5[%c0_15, %c0_16] : memref<256x256xbf16, #tpu.memory_space<vmem>>, vector<256x256xbf16>
    tpu.vector_store %arg5[%c0_15, %c0_16], %22 {strides = array<i32>} : memref<256x256xbf16, #tpu.memory_space<vmem>>, vector<256x256xbf16>,
    return
  }
  func.func @transform_0(%arg0: i32) -> (i32, i32) {
    %c0_i32 = arith.constant 0 : i32
    %c0_i32_0 = arith.constant 0 : i32
    %c0_i32_1 = arith.constant 0 : i32
    return %c0_i32, %c0_i32_0 : i32, i32
  }
  func.func @transform_1(%arg0: i32) -> (i32, i32) {
    %c0_i32 = arith.constant 0 : i32
    %c0_i32_0 = arith.constant 0 : i32
    %c0_i32_1 = arith.constant 0 : i32
    return %c0_i32, %c0_i32_0 : i32, i32
  }
  func.func @transform_2(%arg0: i32) -> (i32, i32) {
    %c0_i32 = arith.constant 0 : i32
    %c0_i32_0 = arith.constant 0 : i32
    %c0_i32_1 = arith.constant 0 : i32
    return %c0_i32, %c0_i32_0 : i32, i32
  }
  func.func @transform_3(%arg0: i32) -> (i32, i32) {
    %c0_i32 = arith.constant 0 : i32
    %c0_i32_0 = arith.constant 0 : i32
    %c0_i32_1 = arith.constant 0 : i32
    return %c0_i32, %c0_i32_0 : i32, i32
  }
  func.func @transform_4(%arg0: i32) -> (i32, i32) {
    %c0_i32 = arith.constant 0 : i32
    %c0_i32_0 = arith.constant 0 : i32
    %c0_i32_1 = arith.constant 0 : i32
    return %c0_i32, %c0_i32_0 : i32, i32
  }
}

</mosaic_0001>

<llo_original>
// kernel: gae_forward.1
$region0: #{gae_forward.1}
  #allocation0 [shape = 'u32[]', space=smem, size = 0x4, offset = 0x4, fixed_abs, tag = 'smem constant byte address 0x4 - core index']
  #allocation1 [shape = 'u32[144,128]{1,0:T(1,128)}', space=vmem, size = 0x12000, scoped, tag = 'internal scratch']
  %s0 = inlined_call_operand.vmem [shape: bf16[256,32], index: 0, kind: input, shape index: {}]
  %s1 = inlined_call_operand.vmem [shape: bf16[256,256], index: 1, kind: input, shape index: {}]
  %s2 = inlined_call_operand.vmem [shape: bf16[32,32], index: 2, kind: input, shape index: {}]
  %s3 = inlined_call_operand.vmem [shape: bf16[32,16], index: 3, kind: input, shape index: {}]
  %s4 = inlined_call_operand.hbm [shape: bf16[256,256], index: 4, kind: output, shape index: {}]
  %s5 = sld [smem:[#allocation0]]
  $region26: #{gae_forward.1} parent=0
    _
  %s7 = ssub.s32 1, %s5
  %s8 = scalar_select 0, %s7, %s5
  $region1: #{gae_forward.1} parent=0
    #allocation2 [shape = 'u8[131072]{0}', space=vmem, size = 0x20000, scoped, tag = 'output window, operand 0, single buffered']
    #allocation3 [shape = 's32[1]{0}', space=sflag, size = 0x4, scoped, tag = 'scoped memory for gae_forward.1']
    %9 = vsyncpa [#allocation3], 0
    // Predicated region
    $region2: #{gae_forward.1} parent=1 // pred_check
      _
    $region3: #{gae_forward.1} parent=1 // pred_check_branch
      %11 = sbr.rel (0) target = $region5
    $region4: #{gae_forward.1} parent=1 // pred_region
      _
    $region5: #{gae_forward.1} parent=1 // pred_fallthru
      _
    // Predicated region
    $region6: #{gae_forward.1} parent=1 // pred_check
      _
    $region7: #{gae_forward.1} parent=1 // pred_check_branch
      %13 = sbr.rel (0) target = $region9
    $region8: #{gae_forward.1} parent=1 // pred_region
      _
    $region9: #{gae_forward.1} parent=1 // pred_fallthru
      _
    // Predicated region
    $region10: #{gae_forward.1} parent=1 // pred_check
      _
    $region11: #{gae_forward.1} parent=1 // pred_check_branch
      %15 = sbr.rel (0) target = $region13
    $region12: #{gae_forward.1} parent=1 // pred_region
      _
    $region13: #{gae_forward.1} parent=1 // pred_fallthru
      _
    // Predicated region
    $region14: #{gae_forward.1} parent=1 // pred_check
      _
    $region15: #{gae_forward.1} parent=1 // pred_check_branch
      %17 = sbr.rel (0) target = $region17
    $region16: #{gae_forward.1} parent=1 // pred_region
      _
    $region17: #{gae_forward.1} parent=1 // pred_fallthru
      _
    %v19 = vld [vmem:[%s1] sm:$0xff]
    %v20 = vld [vmem:[%s1 + $0x8] sm:$0xff]
    %v21 = vld [vmem:[%s1 + $0x10] sm:$0xff]
    %v22 = vld [vmem:[%s1 + $0x18] sm:$0xff]
    %v23 = vld [vmem:[%s1 + $0x20] sm:$0xff]
    %v24 = vld [vmem:[%s1 + $0x28] sm:$0xff]
    %v25 = vld [vmem:[%s1 + $0x30] sm:$0xff]
    %v26 = vld [vmem:[%s1 + $0x38] sm:$0xff]
    %v27 = vld [vmem:[%s1 + $0x40] sm:$0xff]
    %v28 = vld [vmem:[%s1 + $0x48] sm:$0xff]
    %v29 = vld [vmem:[%s1 + $0x50] sm:$0xff]
    %v30 = vld [vmem:[%s1 + $0x58] sm:$0xff]
    %v31 = vld [vmem:[%s1 + $0x60] sm:$0xff]
    %v32 = vld [vmem:[%s1 + $0x68] sm:$0xff]
    %v33 = vld [vmem:[%s1 + $0x70] sm:$0xff]
    %v34 = vld [vmem:[%s1 + $0x78] sm:$0xff]
    %v35 = vld [vmem:[%s1 + $0x80] sm:$0xff]
    %v36 = vld [vmem:[%s1 + $0x88] sm:$0xff]
    %v37 = vld [vmem:[%s1 + $0x90] sm:$0xff]
    %v38 = vld [vmem:[%s1 + $0x98] sm:$0xff]
    %v39 = vld [vmem:[%s1 + $0xa0] sm:$0xff]
    %v40 = vld [vmem:[%s1 + $0xa8] sm:$0xff]
    %v41 = vld [vmem:[%s1 + $0xb0] sm:$0xff]
    %v42 = vld [vmem:[%s1 + $0xb8] sm:$0xff]
    %v43 = vld [vmem:[%s1 + $0xc0] sm:$0xff]
    %v44 = vld [vmem:[%s1 + $0xc8] sm:$0xff]
    %v45 = vld [vmem:[%s1 + $0xd0] sm:$0xff]
    %v46 = vld [vmem:[%s1 + $0xd8] sm:$0xff]
    %v47 = vld [vmem:[%s1 + $0xe0] sm:$0xff]
    %v48 = vld [vmem:[%s1 + $0xe8] sm:$0xff]
    %v49 = vld [vmem:[%s1 + $0xf0] sm:$0xff]
    %v50 = vld [vmem:[%s1 + $0xf8] sm:$0xff]
    %v51 = vld [vmem:[%s0] sm:$0xf]
    %v52 = vld [vmem:[%s0 + $0x4] sm:$0xf]
    %v53 = vld [vmem:[%s0 + $0x8] sm:$0xf]
    %v54 = vld [vmem:[%s0 + $0xc] sm:$0xf]
    %v55 = vld [vmem:[%s0 + $0x10] sm:$0xf]
    %v56 = vld [vmem:[%s0 + $0x14] sm:$0xf]
    %v57 = vld [vmem:[%s0 + $0x18] sm:$0xf]
    %v58 = vld [vmem:[%s0 + $0x1c] sm:$0xf]
    %v59 = vld [vmem:[%s0 + $0x20] sm:$0xf]
    %v60 = vld [vmem:[%s0 + $0x24] sm:$0xf]
    %v61 = vld [vmem:[%s0 + $0x28] sm:$0xf]
    %v62 = vld [vmem:[%s0 + $0x2c] sm:$0xf]
    %v63 = vld [vmem:[%s0 + $0x30] sm:$0xf]
    %v64 = vld [vmem:[%s0 + $0x34] sm:$0xf]
    %v65 = vld [vmem:[%s0 + $0x38] sm:$0xf]
    %v66 = vld [vmem:[%s0 + $0x3c] sm:$0xf]
    %v67 = vld [vmem:[%s0 + $0x40] sm:$0xf]
    %v68 = vld [vmem:[%s0 + $0x44] sm:$0xf]
    %v69 = vld [vmem:[%s0 + $0x48] sm:$0xf]
    %v70 = vld [vmem:[%s0 + $0x4c] sm:$0xf]
    %v71 = vld [vmem:[%s0 + $0x50] sm:$0xf]
    %v72 = vld [vmem:[%s0 + $0x54] sm:$0xf]
    %v73 = vld [vmem:[%s0 + $0x58] sm:$0xf]
    %v74 = vld [vmem:[%s0 + $0x5c] sm:$0xf]
    %v75 = vld [vmem:[%s0 + $0x60] sm:$0xf]
    %v76 = vld [vmem:[%s0 + $0x64] sm:$0xf]
    %v77 = vld [vmem:[%s0 + $0x68] sm:$0xf]
    %v78 = vld [vmem:[%s0 + $0x6c] sm:$0xf]
    %v79 = vld [vmem:[%s0 + $0x70] sm:$0xf]
    %v80 = vld [vmem:[%s0 + $0x74] sm:$0xf]
    %v81 = vld [vmem:[%s0 + $0x78] sm:$0xf]
    %v82 = vld [vmem:[%s0 + $0x7c] sm:$0xf]
    %v83 = vld [vmem:[%s2] sm:$0xf]
    %v84 = vld [vmem:[%s2 + $0x4] sm:$0xf]
    %v85 = vld [vmem:[%s2 + $0x8] sm:$0xf]
    %v86 = vld [vmem:[%s2 + $0xc] sm:$0xf]
    %v119 = vunpack.c.l.b16 %v51
    %v120 = vunpack.c.l.b16 %v52
    %v121 = vunpack.c.l.b16 %v53
    %v122 = vunpack.c.l.b16 %v54
    %v123 = vunpack.c.l.b16 %v55
    %v124 = vunpack.c.l.b16 %v56
    %v125 = vunpack.c.l.b16 %v57
    %v126 = vunpack.c.l.b16 %v58
    %v127 = vunpack.c.l.b16 %v59
    %v128 = vunpack.c.l.b16 %v60
    %v129 = vunpack.c.l.b16 %v61
    %v130 = vunpack.c.l.b16 %v62
    %v131 = vunpack.c.l.b16 %v63
    %v132 = vunpack.c.l.b16 %v64
    %v133 = vunpack.c.l.b16 %v65
    %v134 = vunpack.c.l.b16 %v66
    %v135 = vunpack.c.l.b16 %v67
    %v136 = vunpack.c.l.b16 %v68
    %v137 = vunpack.c.l.b16 %v69
    %v138 = vunpack.c.l.b16 %v70
    %v139 = vunpack.c.l.b16 %v71
    %v140 = vunpack.c.l.b16 %v72
    %v141 = vunpack.c.l.b16 %v73
    %v142 = vunpack.c.l.b16 %v74
    %v143 = vunpack.c.l.b16 %v75
    %v144 = vunpack.c.l.b16 %v76
    %v145 = vunpack.c.l.b16 %v77
    %v146 = vunpack.c.l.b16 %v78
    %v147 = vunpack.c.l.b16 %v79
    %v148 = vunpack.c.l.b16 %v80
    %v149 = vunpack.c.l.b16 %v81
    %v150 = vunpack.c.l.b16 %v82
    %v151 = vpack.c.b16 %v120, %v119
    %v152 = vpack.c.b16 %v122, %v121
    %v153 = vpack.c.b16 %v124, %v123
    %v154 = vpack.c.b16 %v126, %v125
    %v155 = vpack.c.b16 %v128, %v127
    %v156 = vpack.c.b16 %v130, %v129
    %v157 = vpack.c.b16 %v132, %v131
    %v158 = vpack.c.b16 %v134, %v133
    %v159 = vpack.c.b16 %v136, %v135
    %v160 = vpack.c.b16 %v138, %v137
    %v161 = vpack.c.b16 %v140, %v139
    %v162 = vpack.c.b16 %v142, %v141
    %v163 = vpack.c.b16 %v144, %v143
    %v164 = vpack.c.b16 %v146, %v145
    %v165 = vpack.c.b16 %v148, %v147
    %v166 = vpack.c.b16 %v150, %v149
    %v171 = vunpack.c.l.b16 %v83
    %v172 = vunpack.c.l.b16 %v84
    %v173 = vunpack.c.l.b16 %v85
    %v174 = vunpack.c.l.b16 %v86
    %v175 = vpack.c.b16 %v172, %v171
    %v176 = vpack.c.b16 %v174, %v173
    %vm179 = vcmask 261120
    %v181 = vsel %vm179, %v151, 0
    %v184 = vsel %vm179, %v152, 0
    %v187 = vsel %vm179, %v153, 0
    %v190 = vsel %vm179, %v154, 0
    %v193 = vsel %vm179, %v155, 0
    %v196 = vsel %vm179, %v156, 0
    %v199 = vsel %vm179, %v157, 0
    %v202 = vsel %vm179, %v158, 0
    %v205 = vsel %vm179, %v159, 0
    %v208 = vsel %vm179, %v160, 0
    %v211 = vsel %vm179, %v161, 0
    %v214 = vsel %vm179, %v162, 0
    %v217 = vsel %vm179, %v163, 0
    %v220 = vsel %vm179, %v164, 0
    %v223 = vsel %vm179, %v165, 0
    %v226 = vsel %vm179, %v166, 0
    %228 = vmatprep.subr.bf16.mxu0 0
    %229 = vmatpush1.bf16.msra.mxu0 0
    %230 = vmatprep.subr.bf16.mxu0 0
    %231 = vmatpush1.bf16.msra.mxu0 0
    %232 = vmatprep.subr.bf16.mxu0 0
    %233 = vmatpush1.bf16.msra.mxu0 0
    %234 = vmatprep.subr.bf16.mxu0 0
    %235 = vmatpush1.bf16.msra.mxu0 0
    %236 = vmatprep.subr.bf16.mxu0 0
    %237 = vmatpush1.bf16.msra.mxu0 0
    %238 = vmatprep.subr.bf16.mxu0 0
    %239 = vmatpush1.bf16.msra.mxu0 0
    %240 = vmatprep.subr.bf16.mxu0 0
    %241 = vmatpush1.bf16.msra.mxu0 %v176
    %242 = vmatprep.subr.bf16.mxu0 0
    %243 = vmatpush1.bf16.msra.mxu0 %v175
    %244 = vmatprep.subr.bf16.mxu0 0
    %245 = vmatpush2.bf16.msra.mxu0 0
    %246 = vmatprep.subr.bf16.mxu0 0
    %247 = vmatpush2.bf16.msra.mxu0 0
    %248 = vmatprep.subr.bf16.mxu0 0
    %249 = vmatpush2.bf16.msra.mxu0 0
    %250 = vmatprep.subr.bf16.mxu0 0
    %251 = vmatpush2.bf16.msra.mxu0 0
    %252 = vmatprep.subr.bf16.mxu0 0
    %253 = vmatpush2.bf16.msra.mxu0 0
    %254 = vmatprep.subr.bf16.mxu0 0
    %255 = vmatpush2.bf16.msra.mxu0 0
    %256 = vmatprep.subr.bf16.mxu0 0
    %257 = vmatpush2.bf16.msra.mxu0 0
    %258 = vmatprep.subr.bf16.mxu0 0
    %259 = vmatpush2.bf16.msra.mxu0 0
    %260 = vmatprep.mubr.bf16.mxu0 0
    %261 = vmatmul.mubr.bf16.gmra.mxu0 %v181
    %v262 = vpop.f32.mrf.mxu0
    %v263 = vadd.f32 0.0, %v262
    %v264 = vpop.f32.mrf.mxu0
    %v265 = vpop.f32.mrf.mxu0
    %v266 = vadd.f32 0.0, %v265
    %v267 = vpop.f32.mrf.mxu0
    %268 = vmatprep.mubr.bf16.mxu0 0
    %269 = vmatmul.mubr.bf16.gmra.mxu0 %v184
    %v270 = vpop.f32.mrf.mxu0
    %v271 = vadd.f32 0.0, %v270
    %v272 = vpop.f32.mrf.mxu0
    %v273 = vpop.f32.mrf.mxu0
    %v274 = vadd.f32 0.0, %v273
    %v275 = vpop.f32.mrf.mxu0
    %276 = vmatprep.mubr.bf16.mxu0 0
    %277 = vmatmul.mubr.bf16.gmra.mxu0 %v187
    %v278 = vpop.f32.mrf.mxu0
    %v279 = vadd.f32 0.0, %v278
    %v280 = vpop.f32.mrf.mxu0
    %v281 = vpop.f32.mrf.mxu0
    %v282 = vadd.f32 0.0, %v281
    %v283 = vpop.f32.mrf.mxu0
    %284 = vmatprep.mubr.bf16.mxu0 0
    %285 = vmatmul.mubr.bf16.gmra.mxu0 %v190
    %v286 = vpop.f32.mrf.mxu0
    %v287 = vadd.f32 0.0, %v286
    %v288 = vpop.f32.mrf.mxu0
    %v289 = vpop.f32.mrf.mxu0
    %v290 = vadd.f32 0.0, %v289
    %v291 = vpop.f32.mrf.mxu0
    %292 = vmatprep.mubr.bf16.mxu0 0
    %293 = vmatmul.mubr.bf16.gmra.mxu0 %v193
    %v294 = vpop.f32.mrf.mxu0
    %v295 = vadd.f32 0.0, %v294
    %v296 = vpop.f32.mrf.mxu0
    %v297 = vpop.f32.mrf.mxu0
    %v298 = vadd.f32 0.0, %v297
    %v299 = vpop.f32.mrf.mxu0
    %300 = vmatprep.mubr.bf16.mxu0 0
    %301 = vmatmul.mubr.bf16.gmra.mxu0 %v196
    %v302 = vpop.f32.mrf.mxu0
    %v303 = vadd.f32 0.0, %v302
    %v304 = vpop.f32.mrf.mxu0
    %v305 = vpop.f32.mrf.mxu0
    %v306 = vadd.f32 0.0, %v305
    %v307 = vpop.f32.mrf.mxu0
    %308 = vmatprep.mubr.bf16.mxu0 0
    %309 = vmatmul.mubr.bf16.gmra.mxu0 %v199
    %v310 = vpop.f32.mrf.mxu0
    %v311 = vadd.f32 0.0, %v310
    %v312 = vpop.f32.mrf.mxu0
    %v313 = vpop.f32.mrf.mxu0
    %v314 = vadd.f32 0.0, %v313
    %v315 = vpop.f32.mrf.mxu0
    %316 = vmatprep.mubr.bf16.mxu0 0
    %317 = vmatmul.mubr.bf16.gmra.mxu0 %v202
    %v318 = vpop.f32.mrf.mxu0
    %v319 = vadd.f32 0.0, %v318
    %v320 = vpop.f32.mrf.mxu0
    %v321 = vpop.f32.mrf.mxu0
    %v322 = vadd.f32 0.0, %v321
    %v323 = vpop.f32.mrf.mxu0
    %324 = vmatprep.mubr.bf16.mxu0 0
    %325 = vmatmul.mubr.bf16.gmra.mxu0 %v205
    %v326 = vpop.f32.mrf.mxu0
    %v327 = vadd.f32 0.0, %v326
    %v328 = vpop.f32.mrf.mxu0
    %v329 = vpop.f32.mrf.mxu0
    %v330 = vadd.f32 0.0, %v329
    %v331 = vpop.f32.mrf.mxu0
    %332 = vmatprep.mubr.bf16.mxu0 0
    %333 = vmatmul.mubr.bf16.gmra.mxu0 %v208
    %v334 = vpop.f32.mrf.mxu0
    %v335 = vadd.f32 0.0, %v334
    %v336 = vpop.f32.mrf.mxu0
    %v337 = vpop.f32.mrf.mxu0
    %v338 = vadd.f32 0.0, %v337
    %v339 = vpop.f32.mrf.mxu0
    %340 = vmatprep.mubr.bf16.mxu0 0
    %341 = vmatmul.mubr.bf16.gmra.mxu0 %v211
    %v342 = vpop.f32.mrf.mxu0
    %v343 = vadd.f32 0.0, %v342
    %v344 = vpop.f32.mrf.mxu0
    %v345 = vpop.f32.mrf.mxu0
    %v346 = vadd.f32 0.0, %v345
    %v347 = vpop.f32.mrf.mxu0
    %348 = vmatprep.mubr.bf16.mxu0 0
    %349 = vmatmul.mubr.bf16.gmra.mxu0 %v214
    %v350 = vpop.f32.mrf.mxu0
    %v351 = vadd.f32 0.0, %v350
    %v352 = vpop.f32.mrf.mxu0
    %v353 = vpop.f32.mrf.mxu0
    %v354 = vadd.f32 0.0, %v353
    %v355 = vpop.f32.mrf.mxu0
    %356 = vmatprep.mubr.bf16.mxu0 0
    %357 = vmatmul.mubr.bf16.gmra.mxu0 %v217
    %v358 = vpop.f32.mrf.mxu0
    %v359 = vadd.f32 0.0, %v358
    %v360 = vpop.f32.mrf.mxu0
    %v361 = vpop.f32.mrf.mxu0
    %v362 = vadd.f32 0.0, %v361
    %v363 = vpop.f32.mrf.mxu0
    %364 = vmatprep.mubr.bf16.mxu0 0
    %365 = vmatmul.mubr.bf16.gmra.mxu0 %v220
    %v366 = vpop.f32.mrf.mxu0
    %v367 = vadd.f32 0.0, %v366
    %v368 = vpop.f32.mrf.mxu0
    %v369 = vpop.f32.mrf.mxu0
    %v370 = vadd.f32 0.0, %v369
    %v371 = vpop.f32.mrf.mxu0
    %372 = vmatprep.mubr.bf16.mxu0 0
    %373 = vmatmul.mubr.bf16.gmra.mxu0 %v223
    %v374 = vpop.f32.mrf.mxu0
    %v375 = vadd.f32 0.0, %v374
    %v376 = vpop.f32.mrf.mxu0
    %v377 = vpop.f32.mrf.mxu0
    %v378 = vadd.f32 0.0, %v377
    %v379 = vpop.f32.mrf.mxu0
    %380 = vmatprep.mubr.bf16.mxu0 0
    %381 = vmatmul.mubr.bf16.gmra.mxu0 %v226
    %v382 = vpop.f32.mrf.mxu0
    %v383 = vadd.f32 0.0, %v382
    %v384 = vpop.f32.mrf.mxu0
    %v385 = vpop.f32.mrf.mxu0
    %v386 = vadd.f32 0.0, %v385
    %v387 = vpop.f32.mrf.mxu0
    %388 = vdwg.mxu0
    %v389 = vpack.c.bf16 %v266, %v263
    %v390 = vpack.c.bf16 %v274, %v271
    %v391 = vpack.c.bf16 %v282, %v279
    %v392 = vpack.c.bf16 %v290, %v287
    %v393 = vpack.c.bf16 %v298, %v295
    %v394 = vpack.c.bf16 %v306, %v303
    %v395 = vpack.c.bf16 %v314, %v311
    %v396 = vpack.c.bf16 %v322, %v319
    %v397 = vpack.c.bf16 %v330, %v327
    %v398 = vpack.c.bf16 %v338, %v335
    %v399 = vpack.c.bf16 %v346, %v343
    %v400 = vpack.c.bf16 %v354, %v351
    %v401 = vpack.c.bf16 %v362, %v359
    %v402 = vpack.c.bf16 %v370, %v367
    %v403 = vpack.c.bf16 %v378, %v375
    %v404 = vpack.c.bf16 %v386, %v383
    %v437 = vunpack.c.l.b16 %v19
    %v438 = vunpack.c.h.b16 %v19
    %v439 = vunpack.c.l.b16 %v20
    %v440 = vunpack.c.h.b16 %v20
    %v441 = vunpack.c.l.b16 %v21
    %v442 = vunpack.c.h.b16 %v21
    %v443 = vunpack.c.l.b16 %v22
    %v444 = vunpack.c.h.b16 %v22
    %v445 = vunpack.c.l.b16 %v23
    %v446 = vunpack.c.h.b16 %v23
    %v447 = vunpack.c.l.b16 %v24
    %v448 = vunpack.c.h.b16 %v24
    %v449 = vunpack.c.l.b16 %v25
    %v450 = vunpack.c.h.b16 %v25
    %v451 = vunpack.c.l.b16 %v26
    %v452 = vunpack.c.h.b16 %v26
    %v453 = vunpack.c.l.b16 %v27
    %v454 = vunpack.c.h.b16 %v27
    %v455 = vunpack.c.l.b16 %v28
    %v456 = vunpack.c.h.b16 %v28
    %v457 = vunpack.c.l.b16 %v29
    %v458 = vunpack.c.h.b16 %v29
    %v459 = vunpack.c.l.b16 %v30
    %v460 = vunpack.c.h.b16 %v30
    %v461 = vunpack.c.l.b16 %v31
    %v462 = vunpack.c.h.b16 %v31
    %v463 = vunpack.c.l.b16 %v32
    %v464 = vunpack.c.h.b16 %v32
    %v465 = vunpack.c.l.b16 %v33
    %v466 = vunpack.c.h.b16 %v33
    %v467 = vunpack.c.l.b16 %v34
    %v468 = vunpack.c.h.b16 %v34
    %v469 = vunpack.c.l.b16 %v35
    %v470 = vunpack.c.h.b16 %v35
    %v471 = vunpack.c.l.b16 %v36
    %v472 = vunpack.c.h.b16 %v36
    %v473 = vunpack.c.l.b16 %v37
    %v474 = vunpack.c.h.b16 %v37
    %v475 = vunpack.c.l.b16 %v38
    %v476 = vunpack.c.h.b16 %v38
    %v477 = vunpack.c.l.b16 %v39
    %v478 = vunpack.c.h.b16 %v39
    %v479 = vunpack.c.l.b16 %v40
    %v480 = vunpack.c.h.b16 %v40
    %v481 = vunpack.c.l.b16 %v41
    %v482 = vunpack.c.h.b16 %v41
    %v483 = vunpack.c.l.b16 %v42
    %v484 = vunpack.c.h.b16 %v42
    %v485 = vunpack.c.l.b16 %v43
    %v486 = vunpack.c.h.b16 %v43
    %v487 = vunpack.c.l.b16 %v44
    %v488 = vunpack.c.h.b16 %v44
    %v489 = vunpack.c.l.b16 %v45
    %v490 = vunpack.c.h.b16 %v45
    %v491 = vunpack.c.l.b16 %v46
    %v492 = vunpack.c.h.b16 %v46
    %v493 = vunpack.c.l.b16 %v47
    %v494 = vunpack.c.h.b16 %v47
    %v495 = vunpack.c.l.b16 %v48
    %v496 = vunpack.c.h.b16 %v48
    %v497 = vunpack.c.l.b16 %v49
    %v498 = vunpack.c.h.b16 %v49
    %v499 = vunpack.c.l.b16 %v50
    %v500 = vunpack.c.h.b16 %v50
    %v501 = vpack.c.b16 %v439, %v437
    %v502 = vpack.c.b16 %v440, %v438
    %v503 = vpack.c.b16 %v443, %v441
    %v504 = vpack.c.b16 %v444, %v442
    %v505 = vpack.c.b16 %v447, %v445
    %v506 = vpack.c.b16 %v448, %v446
    %v507 = vpack.c.b16 %v451, %v449
    %v508 = vpack.c.b16 %v452, %v450
    %v509 = vpack.c.b16 %v455, %v453
    %v510 = vpack.c.b16 %v456, %v454
    %v511 = vpack.c.b16 %v459, %v457
    %v512 = vpack.c.b16 %v460, %v458
    %v513 = vpack.c.b16 %v463, %v461
    %v514 = vpack.c.b16 %v464, %v462
    %v515 = vpack.c.b16 %v467, %v465
    %v516 = vpack.c.b16 %v468, %v466
    %v517 = vpack.c.b16 %v471, %v469
    %v518 = vpack.c.b16 %v472, %v470
    %v519 = vpack.c.b16 %v475, %v473
    %v520 = vpack.c.b16 %v476, %v474
    %v521 = vpack.c.b16 %v479, %v477
    %v522 = vpack.c.b16 %v480, %v478
    %v523 = vpack.c.b16 %v483, %v481
    %v524 = vpack.c.b16 %v484, %v482
    %v525 = vpack.c.b16 %v487, %v485
    %v526 = vpack.c.b16 %v488, %v486
    %v527 = vpack.c.b16 %v491, %v489
    %v528 = vpack.c.b16 %v492, %v490
    %v529 = vpack.c.b16 %v495, %v493
    %v530 = vpack.c.b16 %v496, %v494
    %v531 = vpack.c.b16 %v499, %v497
    %v532 = vpack.c.b16 %v500, %v498
    %565 = vmatprep.subr.bf16.mxu0 0
    %566 = vmatpush1.bf16.msra.mxu0 %v396
    %567 = vmatprep.subr.bf16.mxu0 0
    %568 = vmatpush1.bf16.msra.mxu0 %v395
    %569 = vmatprep.subr.bf16.mxu0 0
    %570 = vmatpush1.bf16.msra.mxu0 %v394
    %571 = vmatprep.subr.bf16.mxu0 0
    %572 = vmatpush1.bf16.msra.mxu0 %v393
    %573 = vmatprep.subr.bf16.mxu0 0
    %574 = vmatpush1.bf16.msra.mxu0 %v392
    %575 = vmatprep.subr.bf16.mxu0 0
    %576 = vmatpush1.bf16.msra.mxu0 %v391
    %577 = vmatprep.subr.bf16.mxu0 0
    %578 = vmatpush1.bf16.msra.mxu0 %v390
    %579 = vmatprep.subr.bf16.mxu0 0
    %580 = vmatpush1.bf16.msra.mxu0 %v389
    %581 = vmatprep.subr.bf16.mxu0 0
    %582 = vmatpush2.bf16.msra.mxu0 %v404
    %583 = vmatprep.subr.bf16.mxu0 0
    %584 = vmatpush2.bf16.msra.mxu0 %v403
    %585 = vmatprep.subr.bf16.mxu0 0
    %586 = vmatpush2.bf16.msra.mxu0 %v402
    %587 = vmatprep.subr.bf16.mxu0 0
    %588 = vmatpush2.bf16.msra.mxu0 %v401
    %589 = vmatprep.subr.bf16.mxu0 0
    %590 = vmatpush2.bf16.msra.mxu0 %v400
    %591 = vmatprep.subr.bf16.mxu0 0
    %592 = vmatpush2.bf16.msra.mxu0 %v399
    %593 = vmatprep.subr.bf16.mxu0 0
    %594 = vmatpush2.bf16.msra.mxu0 %v398
    %595 = vmatprep.subr.bf16.mxu0 0
    %596 = vmatpush2.bf16.msra.mxu0 %v397
    %597 = vmatprep.mubr.bf16.mxu0 %v502
    %598 = vmatmul.mubr.bf16.gmra.mxu0 %v501
    %v599 = vpop.f32.mrf.mxu0
    %v600 = vadd.f32 0.0, %v599
    %v601 = vpop.f32.mrf.mxu0
    %v602 = vpop.f32.mrf.mxu0
    %v603 = vadd.f32 0.0, %v602
    %v604 = vpop.f32.mrf.mxu0
    %605 = vmatprep.mubr.bf16.mxu0 %v504
    %606 = vmatmul.mubr.bf16.gmra.mxu0 %v503
    %v607 = vpop.f32.mrf.mxu0
    %v608 = vadd.f32 0.0, %v607
    %v609 = vpop.f32.mrf.mxu0
    %v610 = vpop.f32.mrf.mxu0
    %v611 = vadd.f32 0.0, %v610
    %v612 = vpop.f32.mrf.mxu0
    %613 = vmatprep.mubr.bf16.mxu0 %v506
    %614 = vmatmul.mubr.bf16.gmra.mxu0 %v505
    %v615 = vpop.f32.mrf.mxu0
    %v616 = vadd.f32 0.0, %v615
    %v617 = vpop.f32.mrf.mxu0
    %v618 = vpop.f32.mrf.mxu0
    %v619 = vadd.f32 0.0, %v618
    %v620 = vpop.f32.mrf.mxu0
    %621 = vmatprep.mubr.bf16.mxu0 %v508
    %622 = vmatmul.mubr.bf16.gmra.mxu0 %v507
    %v623 = vpop.f32.mrf.mxu0
    %v624 = vadd.f32 0.0, %v623
    %v625 = vpop.f32.mrf.mxu0
    %v626 = vpop.f32.mrf.mxu0
    %v627 = vadd.f32 0.0, %v626
    %v628 = vpop.f32.mrf.mxu0
    %629 = vmatprep.mubr.bf16.mxu0 %v510
    %630 = vmatmul.mubr.bf16.gmra.mxu0 %v509
    %v631 = vpop.f32.mrf.mxu0
    %v632 = vadd.f32 0.0, %v631
    %v633 = vpop.f32.mrf.mxu0
    %v634 = vpop.f32.mrf.mxu0
    %v635 = vadd.f32 0.0, %v634
    %v636 = vpop.f32.mrf.mxu0
    %637 = vmatprep.mubr.bf16.mxu0 %v512
    %638 = vmatmul.mubr.bf16.gmra.mxu0 %v511
    %v639 = vpop.f32.mrf.mxu0
    %v640 = vadd.f32 0.0, %v639
    %v641 = vpop.f32.mrf.mxu0
    %v642 = vpop.f32.mrf.mxu0
    %v643 = vadd.f32 0.0, %v642
    %v644 = vpop.f32.mrf.mxu0
    %645 = vmatprep.mubr.bf16.mxu0 %v514
    %646 = vmatmul.mubr.bf16.gmra.mxu0 %v513
    %v647 = vpop.f32.mrf.mxu0
    %v648 = vadd.f32 0.0, %v647
    %v649 = vpop.f32.mrf.mxu0
    %v650 = vpop.f32.mrf.mxu0
    %v651 = vadd.f32 0.0, %v650
    %v652 = vpop.f32.mrf.mxu0
    %653 = vmatprep.mubr.bf16.mxu0 %v516
    %654 = vmatmul.mubr.bf16.gmra.mxu0 %v515
    %v655 = vpop.f32.mrf.mxu0
    %v656 = vadd.f32 0.0, %v655
    %v657 = vpop.f32.mrf.mxu0
    %v658 = vpop.f32.mrf.mxu0
    %v659 = vadd.f32 0.0, %v658
    %v660 = vpop.f32.mrf.mxu0
    %661 = vmatprep.mubr.bf16.mxu0 %v518
    %662 = vmatmul.mubr.bf16.gmra.mxu0 %v517
    %v663 = vpop.f32.mrf.mxu0
    %v664 = vadd.f32 0.0, %v663
    %v665 = vpop.f32.mrf.mxu0
    %v666 = vpop.f32.mrf.mxu0
    %v667 = vadd.f32 0.0, %v666
    %v668 = vpop.f32.mrf.mxu0
    %669 = vmatprep.mubr.bf16.mxu0 %v520
    %670 = vmatmul.mubr.bf16.gmra.mxu0 %v519
    %v671 = vpop.f32.mrf.mxu0
    %v672 = vadd.f32 0.0, %v671
    %v673 = vpop.f32.mrf.mxu0
    %v674 = vpop.f32.mrf.mxu0
    %v675 = vadd.f32 0.0, %v674
    %v676 = vpop.f32.mrf.mxu0
    %677 = vmatprep.mubr.bf16.mxu0 %v522
    %678 = vmatmul.mubr.bf16.gmra.mxu0 %v521
    %v679 = vpop.f32.mrf.mxu0
    %v680 = vadd.f32 0.0, %v679
    %v681 = vpop.f32.mrf.mxu0
    %v682 = vpop.f32.mrf.mxu0
    %v683 = vadd.f32 0.0, %v682
    %v684 = vpop.f32.mrf.mxu0
    %685 = vmatprep.mubr.bf16.mxu0 %v524
    %686 = vmatmul.mubr.bf16.gmra.mxu0 %v523
    %v687 = vpop.f32.mrf.mxu0
    %v688 = vadd.f32 0.0, %v687
    %v689 = vpop.f32.mrf.mxu0
    %v690 = vpop.f32.mrf.mxu0
    %v691 = vadd.f32 0.0, %v690
    %v692 = vpop.f32.mrf.mxu0
    %693 = vmatprep.mubr.bf16.mxu0 %v526
    %694 = vmatmul.mubr.bf16.gmra.mxu0 %v525
    %v695 = vpop.f32.mrf.mxu0
    %v696 = vadd.f32 0.0, %v695
    %v697 = vpop.f32.mrf.mxu0
    %v698 = vpop.f32.mrf.mxu0
    %v699 = vadd.f32 0.0, %v698
    %v700 = vpop.f32.mrf.mxu0
    %701 = vmatprep.mubr.bf16.mxu0 %v528
    %702 = vmatmul.mubr.bf16.gmra.mxu0 %v527
    %v703 = vpop.f32.mrf.mxu0
    %v704 = vadd.f32 0.0, %v703
    %v705 = vpop.f32.mrf.mxu0
    %v706 = vpop.f32.mrf.mxu0
    %v707 = vadd.f32 0.0, %v706
    %v708 = vpop.f32.mrf.mxu0
    %709 = vmatprep.mubr.bf16.mxu0 %v530
    %710 = vmatmul.mubr.bf16.gmra.mxu0 %v529
    %v711 = vpop.f32.mrf.mxu0
    %v712 = vadd.f32 0.0, %v711
    %v713 = vpop.f32.mrf.mxu0
    %v714 = vpop.f32.mrf.mxu0
    %v715 = vadd.f32 0.0, %v714
    %v716 = vpop.f32.mrf.mxu0
    %717 = vmatprep.mubr.bf16.mxu0 %v532
    %718 = vmatmul.mubr.bf16.gmra.mxu0 %v531
    %v719 = vpop.f32.mrf.mxu0
    %v720 = vadd.f32 0.0, %v719
    %v721 = vpop.f32.mrf.mxu0
    %v722 = vpop.f32.mrf.mxu0
    %v723 = vadd.f32 0.0, %v722
    %v724 = vpop.f32.mrf.mxu0
    %725 = vdwg.mxu0
    %v726 = vmax.f32 %v600, 0.0
    %v727 = vmax.f32 %v603, 0.0
    %v728 = vmax.f32 %v608, 0.0
    %v729 = vmax.f32 %v611, 0.0
    %v730 = vmax.f32 %v616, 0.0
    %v731 = vmax.f32 %v619, 0.0
    %v732 = vmax.f32 %v624, 0.0
    %v733 = vmax.f32 %v627, 0.0
    %v734 = vmax.f32 %v632, 0.0
    %v735 = vmax.f32 %v635, 0.0
    %v736 = vmax.f32 %v640, 0.0
    %v737 = vmax.f32 %v643, 0.0
    %v738 = vmax.f32 %v648, 0.0
    %v739 = vmax.f32 %v651, 0.0
    %v740 = vmax.f32 %v656, 0.0
    %v741 = vmax.f32 %v659, 0.0
    %v742 = vmax.f32 %v664, 0.0
    %v743 = vmax.f32 %v667, 0.0
    %v744 = vmax.f32 %v672, 0.0
    %v745 = vmax.f32 %v675, 0.0
    %v746 = vmax.f32 %v680, 0.0
    %v747 = vmax.f32 %v683, 0.0
    %v748 = vmax.f32 %v688, 0.0
    %v749 = vmax.f32 %v691, 0.0
    %v750 = vmax.f32 %v696, 0.0
    %v751 = vmax.f32 %v699, 0.0
    %v752 = vmax.f32 %v704, 0.0
    %v753 = vmax.f32 %v707, 0.0
    %v754 = vmax.f32 %v712, 0.0
    %v755 = vmax.f32 %v715, 0.0
    %v756 = vmax.f32 %v720, 0.0
    %v757 = vmax.f32 %v723, 0.0
    %v758 = vpack.c.bf16 %v727, %v726
    %v759 = vpack.c.bf16 %v729, %v728
    %v760 = vpack.c.bf16 %v731, %v730
    %v761 = vpack.c.bf16 %v733, %v732
    %v762 = vpack.c.bf16 %v735, %v734
    %v763 = vpack.c.bf16 %v737, %v736
    %v764 = vpack.c.bf16 %v739, %v738
    %v765 = vpack.c.bf16 %v741, %v740
    %v766 = vpack.c.bf16 %v743, %v742
    %v767 = vpack.c.bf16 %v745, %v744
    %v768 = vpack.c.bf16 %v747, %v746
    %v769 = vpack.c.bf16 %v749, %v748
    %v770 = vpack.c.bf16 %v751, %v750
    %v771 = vpack.c.bf16 %v753, %v752
    %v772 = vpack.c.bf16 %v755, %v754
    %v773 = vpack.c.bf16 %v757, %v756
    %v774 = vld [vmem:[%s3] sm:$0xf]
    %v775 = vld [vmem:[%s3 + $0x4] sm:$0xf]
    %v776 = vld [vmem:[%s3 + $0x8] sm:$0xf]
    %v777 = vld [vmem:[%s3 + $0xc] sm:$0xf]
    %v782 = vunpack.c.l.b16 %v774
    %v783 = vunpack.c.l.b16 %v775
    %v784 = vunpack.c.l.b16 %v776
    %v785 = vunpack.c.l.b16 %v777
    %v786 = vpack.c.b16 %v783, %v782
    %v787 = vpack.c.b16 %v785, %v784
    %v791 = vsel %vm179, %v758, 0
    %v794 = vsel %vm179, %v759, 0
    %v797 = vsel %vm179, %v760, 0
    %v800 = vsel %vm179, %v761, 0
    %v803 = vsel %vm179, %v762, 0
    %v806 = vsel %vm179, %v763, 0
    %v809 = vsel %vm179, %v764, 0
    %v812 = vsel %vm179, %v765, 0
    %v815 = vsel %vm179, %v766, 0
    %v818 = vsel %vm179, %v767, 0
    %v821 = vsel %vm179, %v768, 0
    %v824 = vsel %vm179, %v769, 0
    %v827 = vsel %vm179, %v770, 0
    %v830 = vsel %vm179, %v771, 0
    %v833 = vsel %vm179, %v772, 0
    %v836 = vsel %vm179, %v773, 0
    %838 = vmatprep.subr.bf16.mxu0 0
    %839 = vmatpush1.bf16.msra.mxu0 0
    %840 = vmatprep.subr.bf16.mxu0 0
    %841 = vmatpush1.bf16.msra.mxu0 0
    %842 = vmatprep.subr.bf16.mxu0 0
    %843 = vmatpush1.bf16.msra.mxu0 0
    %844 = vmatprep.subr.bf16.mxu0 0
    %845 = vmatpush1.bf16.msra.mxu0 0
    %846 = vmatprep.subr.bf16.mxu0 0
    %847 = vmatpush1.bf16.msra.mxu0 0
    %848 = vmatprep.subr.bf16.mxu0 0
    %849 = vmatpush1.bf16.msra.mxu0 0
    %850 = vmatprep.subr.bf16.mxu0 0
    %851 = vmatpush1.bf16.msra.mxu0 %v787
    %852 = vmatprep.subr.bf16.mxu0 0
    %853 = vmatpush1.bf16.msra.mxu0 %v786
    %854 = vmatprep.subr.bf16.mxu0 0
    %855 = vmatpush2.bf16.msra.mxu0 0
    %856 = vmatprep.subr.bf16.mxu0 0
    %857 = vmatpush2.bf16.msra.mxu0 0
    %858 = vmatprep.subr.bf16.mxu0 0
    %859 = vmatpush2.bf16.msra.mxu0 0
    %860 = vmatprep.subr.bf16.mxu0 0
    %861 = vmatpush2.bf16.msra.mxu0 0
    %862 = vmatprep.subr.bf16.mxu0 0
    %863 = vmatpush2.bf16.msra.mxu0 0
    %864 = vmatprep.subr.bf16.mxu0 0
    %865 = vmatpush2.bf16.msra.mxu0 0
    %866 = vmatprep.subr.bf16.mxu0 0
    %867 = vmatpush2.bf16.msra.mxu0 0
    %868 = vmatprep.subr.bf16.mxu0 0
    %869 = vmatpush2.bf16.msra.mxu0 0
    %870 = vmatprep.mubr.bf16.mxu0 0
    %871 = vmatmul.mubr.bf16.gmra.mxu0 %v791
    %v872 = vpop.f32.mrf.mxu0
    %v873 = vadd.f32 0.0, %v872
    %v874 = vpop.f32.mrf.mxu0
    %v875 = vpop.f32.mrf.mxu0
    %v876 = vadd.f32 0.0, %v875
    %v877 = vpop.f32.mrf.mxu0
    %878 = vmatprep.mubr.bf16.mxu0 0
    %879 = vmatmul.mubr.bf16.gmra.mxu0 %v794
    %v880 = vpop.f32.mrf.mxu0
    %v881 = vadd.f32 0.0, %v880
    %v882 = vpop.f32.mrf.mxu0
    %v883 = vpop.f32.mrf.mxu0
    %v884 = vadd.f32 0.0, %v883
    %v885 = vpop.f32.mrf.mxu0
    %886 = vmatprep.mubr.bf16.mxu0 0
    %887 = vmatmul.mubr.bf16.gmra.mxu0 %v797
    %v888 = vpop.f32.mrf.mxu0
    %v889 = vadd.f32 0.0, %v888
    %v890 = vpop.f32.mrf.mxu0
    %v891 = vpop.f32.mrf.mxu0
    %v892 = vadd.f32 0.0, %v891
    %v893 = vpop.f32.mrf.mxu0
    %894 = vmatprep.mubr.bf16.mxu0 0
    %895 = vmatmul.mubr.bf16.gmra.mxu0 %v800
    %v896 = vpop.f32.mrf.mxu0
    %v897 = vadd.f32 0.0, %v896
    %v898 = vpop.f32.mrf.mxu0
    %v899 = vpop.f32.mrf.mxu0
    %v900 = vadd.f32 0.0, %v899
    %v901 = vpop.f32.mrf.mxu0
    %902 = vmatprep.mubr.bf16.mxu0 0
    %903 = vmatmul.mubr.bf16.gmra.mxu0 %v803
    %v904 = vpop.f32.mrf.mxu0
    %v905 = vadd.f32 0.0, %v904
    %v906 = vpop.f32.mrf.mxu0
    %v907 = vpop.f32.mrf.mxu0
    %v908 = vadd.f32 0.0, %v907
    %v909 = vpop.f32.mrf.mxu0
    %910 = vmatprep.mubr.bf16.mxu0 0
    %911 = vmatmul.mubr.bf16.gmra.mxu0 %v806
    %v912 = vpop.f32.mrf.mxu0
    %v913 = vadd.f32 0.0, %v912
    %v914 = vpop.f32.mrf.mxu0
    %v915 = vpop.f32.mrf.mxu0
    %v916 = vadd.f32 0.0, %v915
    %v917 = vpop.f32.mrf.mxu0
    %918 = vmatprep.mubr.bf16.mxu0 0
    %919 = vmatmul.mubr.bf16.gmra.mxu0 %v809
    %v920 = vpop.f32.mrf.mxu0
    %v921 = vadd.f32 0.0, %v920
    %v922 = vpop.f32.mrf.mxu0
    %v923 = vpop.f32.mrf.mxu0
    %v924 = vadd.f32 0.0, %v923
    %v925 = vpop.f32.mrf.mxu0
    %926 = vmatprep.mubr.bf16.mxu0 0
    %927 = vmatmul.mubr.bf16.gmra.mxu0 %v812
    %v928 = vpop.f32.mrf.mxu0
    %v929 = vadd.f32 0.0, %v928
    %v930 = vpop.f32.mrf.mxu0
    %v931 = vpop.f32.mrf.mxu0
    %v932 = vadd.f32 0.0, %v931
    %v933 = vpop.f32.mrf.mxu0
    %934 = vmatprep.mubr.bf16.mxu0 0
    %935 = vmatmul.mubr.bf16.gmra.mxu0 %v815
    %v936 = vpop.f32.mrf.mxu0
    %v937 = vadd.f32 0.0, %v936
    %v938 = vpop.f32.mrf.mxu0
    %v939 = vpop.f32.mrf.mxu0
    %v940 = vadd.f32 0.0, %v939
    %v941 = vpop.f32.mrf.mxu0
    %942 = vmatprep.mubr.bf16.mxu0 0
    %943 = vmatmul.mubr.bf16.gmra.mxu0 %v818
    %v944 = vpop.f32.mrf.mxu0
    %v945 = vadd.f32 0.0, %v944
    %v946 = vpop.f32.mrf.mxu0
    %v947 = vpop.f32.mrf.mxu0
    %v948 = vadd.f32 0.0, %v947
    %v949 = vpop.f32.mrf.mxu0
    %950 = vmatprep.mubr.bf16.mxu0 0
    %951 = vmatmul.mubr.bf16.gmra.mxu0 %v821
    %v952 = vpop.f32.mrf.mxu0
    %v953 = vadd.f32 0.0, %v952
    %v954 = vpop.f32.mrf.mxu0
    %v955 = vpop.f32.mrf.mxu0
    %v956 = vadd.f32 0.0, %v955
    %v957 = vpop.f32.mrf.mxu0
    %958 = vmatprep.mubr.bf16.mxu0 0
    %959 = vmatmul.mubr.bf16.gmra.mxu0 %v824
    %v960 = vpop.f32.mrf.mxu0
    %v961 = vadd.f32 0.0, %v960
    %v962 = vpop.f32.mrf.mxu0
    %v963 = vpop.f32.mrf.mxu0
    %v964 = vadd.f32 0.0, %v963
    %v965 = vpop.f32.mrf.mxu0
    %966 = vmatprep.mubr.bf16.mxu0 0
    %967 = vmatmul.mubr.bf16.gmra.mxu0 %v827
    %v968 = vpop.f32.mrf.mxu0
    %v969 = vadd.f32 0.0, %v968
    %v970 = vpop.f32.mrf.mxu0
    %v971 = vpop.f32.mrf.mxu0
    %v972 = vadd.f32 0.0, %v971
    %v973 = vpop.f32.mrf.mxu0
    %974 = vmatprep.mubr.bf16.mxu0 0
    %975 = vmatmul.mubr.bf16.gmra.mxu0 %v830
    %v976 = vpop.f32.mrf.mxu0
    %v977 = vadd.f32 0.0, %v976
    %v978 = vpop.f32.mrf.mxu0
    %v979 = vpop.f32.mrf.mxu0
    %v980 = vadd.f32 0.0, %v979
    %v981 = vpop.f32.mrf.mxu0
    %982 = vmatprep.mubr.bf16.mxu0 0
    %983 = vmatmul.mubr.bf16.gmra.mxu0 %v833
    %v984 = vpop.f32.mrf.mxu0
    %v985 = vadd.f32 0.0, %v984
    %v986 = vpop.f32.mrf.mxu0
    %v987 = vpop.f32.mrf.mxu0
    %v988 = vadd.f32 0.0, %v987
    %v989 = vpop.f32.mrf.mxu0
    %990 = vmatprep.mubr.bf16.mxu0 0
    %991 = vmatmul.mubr.bf16.gmra.mxu0 %v836
    %v992 = vpop.f32.mrf.mxu0
    %v993 = vadd.f32 0.0, %v992
    %v994 = vpop.f32.mrf.mxu0
    %v995 = vpop.f32.mrf.mxu0
    %v996 = vadd.f32 0.0, %v995
    %v997 = vpop.f32.mrf.mxu0
    %998 = vdwg.mxu0
    %v999 = vpack.c.bf16 %v876, %v873
    %v1000 = vpack.c.bf16 %v884, %v881
    %v1001 = vpack.c.bf16 %v892, %v889
    %v1002 = vpack.c.bf16 %v900, %v897
    %v1003 = vpack.c.bf16 %v908, %v905
    %v1004 = vpack.c.bf16 %v916, %v913
    %v1005 = vpack.c.bf16 %v924, %v921
    %v1006 = vpack.c.bf16 %v932, %v929
    %v1007 = vpack.c.bf16 %v940, %v937
    %v1008 = vpack.c.bf16 %v948, %v945
    %v1009 = vpack.c.bf16 %v956, %v953
    %v1010 = vpack.c.bf16 %v964, %v961
    %v1011 = vpack.c.bf16 %v972, %v969
    %v1012 = vpack.c.bf16 %v980, %v977
    %v1013 = vpack.c.bf16 %v988, %v985
    %v1014 = vpack.c.bf16 %v996, %v993
    %1015 = vmatprep.subr.bf16.mxu0 0
    %1016 = vmatpush1.bf16.msra.mxu0 %v1006
    %1017 = vmatprep.subr.bf16.mxu0 0
    %1018 = vmatpush1.bf16.msra.mxu0 %v1005
    %1019 = vmatprep.subr.bf16.mxu0 0
    %1020 = vmatpush1.bf16.msra.mxu0 %v1004
    %1021 = vmatprep.subr.bf16.mxu0 0
    %1022 = vmatpush1.bf16.msra.mxu0 %v1003
    %1023 = vmatprep.subr.bf16.mxu0 0
    %1024 = vmatpush1.bf16.msra.mxu0 %v1002
    %1025 = vmatprep.subr.bf16.mxu0 0
    %1026 = vmatpush1.bf16.msra.mxu0 %v1001
    %1027 = vmatprep.subr.bf16.mxu0 0
    %1028 = vmatpush1.bf16.msra.mxu0 %v1000
    %1029 = vmatprep.subr.bf16.mxu0 0
    %1030 = vmatpush1.bf16.msra.mxu0 %v999
    %1031 = vmatprep.subr.bf16.mxu0 0
    %1032 = vmatpush2.bf16.msra.mxu0 %v1014
    %1033 = vmatprep.subr.bf16.mxu0 0
    %1034 = vmatpush2.bf16.msra.mxu0 %v1013
    %1035 = vmatprep.subr.bf16.mxu0 0
    %1036 = vmatpush2.bf16.msra.mxu0 %v1012
    %1037 = vmatprep.subr.bf16.mxu0 0
    %1038 = vmatpush2.bf16.msra.mxu0 %v1011
    %1039 = vmatprep.subr.bf16.mxu0 0
    %1040 = vmatpush2.bf16.msra.mxu0 %v1010
    %1041 = vmatprep.subr.bf16.mxu0 0
    %1042 = vmatpush2.bf16.msra.mxu0 %v1009
    %1043 = vmatprep.subr.bf16.mxu0 0
    %1044 = vmatpush2.bf16.msra.mxu0 %v1008
    %1045 = vmatprep.subr.bf16.mxu0 0
    %1046 = vmatpush2.bf16.msra.mxu0 %v1007
    %1047 = vmatprep.mubr.bf16.mxu0 %v502
    %1048 = vmatmul.mubr.bf16.gmra.mxu0 %v501
    %v1049 = vpop.f32.mrf.mxu0
    %v1050 = vadd.f32 0.0, %v1049
    %v1051 = vpop.f32.mrf.mxu0
    %v1052 = vpop.f32.mrf.mxu0
    %v1053 = vadd.f32 0.0, %v1052
    %v1054 = vpop.f32.mrf.mxu0
    %1055 = vmatprep.mubr.bf16.mxu0 %v504
    %1056 = vmatmul.mubr.bf16.gmra.mxu0 %v503
    %v1057 = vpop.f32.mrf.mxu0
    %v1058 = vadd.f32 0.0, %v1057
    %v1059 = vpop.f32.mrf.mxu0
    %v1060 = vpop.f32.mrf.mxu0
    %v1061 = vadd.f32 0.0, %v1060
    %v1062 = vpop.f32.mrf.mxu0
    %1063 = vmatprep.mubr.bf16.mxu0 %v506
    %1064 = vmatmul.mubr.bf16.gmra.mxu0 %v505
    %v1065 = vpop.f32.mrf.mxu0
    %v1066 = vadd.f32 0.0, %v1065
    %v1067 = vpop.f32.mrf.mxu0
    %v1068 = vpop.f32.mrf.mxu0
    %v1069 = vadd.f32 0.0, %v1068
    %v1070 = vpop.f32.mrf.mxu0
    %1071 = vmatprep.mubr.bf16.mxu0 %v508
    %1072 = vmatmul.mubr.bf16.gmra.mxu0 %v507
    %v1073 = vpop.f32.mrf.mxu0
    %v1074 = vadd.f32 0.0, %v1073
    %v1075 = vpop.f32.mrf.mxu0
    %v1076 = vpop.f32.mrf.mxu0
    %v1077 = vadd.f32 0.0, %v1076
    %v1078 = vpop.f32.mrf.mxu0
    %1079 = vmatprep.mubr.bf16.mxu0 %v510
    %1080 = vmatmul.mubr.bf16.gmra.mxu0 %v509
    %v1081 = vpop.f32.mrf.mxu0
    %v1082 = vadd.f32 0.0, %v1081
    %v1083 = vpop.f32.mrf.mxu0
    %v1084 = vpop.f32.mrf.mxu0
    %v1085 = vadd.f32 0.0, %v1084
    %v1086 = vpop.f32.mrf.mxu0
    %1087 = vmatprep.mubr.bf16.mxu0 %v512
    %1088 = vmatmul.mubr.bf16.gmra.mxu0 %v511
    %v1089 = vpop.f32.mrf.mxu0
    %v1090 = vadd.f32 0.0, %v1089
    %v1091 = vpop.f32.mrf.mxu0
    %v1092 = vpop.f32.mrf.mxu0
    %v1093 = vadd.f32 0.0, %v1092
    %v1094 = vpop.f32.mrf.mxu0
    %1095 = vmatprep.mubr.bf16.mxu0 %v514
    %1096 = vmatmul.mubr.bf16.gmra.mxu0 %v513
    %v1097 = vpop.f32.mrf.mxu0
    %v1098 = vadd.f32 0.0, %v1097
    %v1099 = vpop.f32.mrf.mxu0
    %v1100 = vpop.f32.mrf.mxu0
    %v1101 = vadd.f32 0.0, %v1100
    %v1102 = vpop.f32.mrf.mxu0
    %1103 = vmatprep.mubr.bf16.mxu0 %v516
    %1104 = vmatmul.mubr.bf16.gmra.mxu0 %v515
    %v1105 = vpop.f32.mrf.mxu0
    %v1106 = vadd.f32 0.0, %v1105
    %v1107 = vpop.f32.mrf.mxu0
    %v1108 = vpop.f32.mrf.mxu0
    %v1109 = vadd.f32 0.0, %v1108
    %v1110 = vpop.f32.mrf.mxu0
    %1111 = vmatprep.mubr.bf16.mxu0 %v518
    %1112 = vmatmul.mubr.bf16.gmra.mxu0 %v517
    %v1113 = vpop.f32.mrf.mxu0
    %v1114 = vadd.f32 0.0, %v1113
    %v1115 = vpop.f32.mrf.mxu0
    %v1116 = vpop.f32.mrf.mxu0
    %v1117 = vadd.f32 0.0, %v1116
    %v1118 = vpop.f32.mrf.mxu0
    %1119 = vmatprep.mubr.bf16.mxu0 %v520
    %1120 = vmatmul.mubr.bf16.gmra.mxu0 %v519
    %v1121 = vpop.f32.mrf.mxu0
    %v1122 = vadd.f32 0.0, %v1121
    %v1123 = vpop.f32.mrf.mxu0
    %v1124 = vpop.f32.mrf.mxu0
    %v1125 = vadd.f32 0.0, %v1124
    %v1126 = vpop.f32.mrf.mxu0
    %1127 = vmatprep.mubr.bf16.mxu0 %v522
    %1128 = vmatmul.mubr.bf16.gmra.mxu0 %v521
    %v1129 = vpop.f32.mrf.mxu0
    %v1130 = vadd.f32 0.0, %v1129
    %v1131 = vpop.f32.mrf.mxu0
    %v1132 = vpop.f32.mrf.mxu0
    %v1133 = vadd.f32 0.0, %v1132
    %v1134 = vpop.f32.mrf.mxu0
    %1135 = vmatprep.mubr.bf16.mxu0 %v524
    %1136 = vmatmul.mubr.bf16.gmra.mxu0 %v523
    %v1137 = vpop.f32.mrf.mxu0
    %v1138 = vadd.f32 0.0, %v1137
    %v1139 = vpop.f32.mrf.mxu0
    %v1140 = vpop.f32.mrf.mxu0
    %v1141 = vadd.f32 0.0, %v1140
    %v1142 = vpop.f32.mrf.mxu0
    %1143 = vmatprep.mubr.bf16.mxu0 %v526
    %1144 = vmatmul.mubr.bf16.gmra.mxu0 %v525
    %v1145 = vpop.f32.mrf.mxu0
    %v1146 = vadd.f32 0.0, %v1145
    %v1147 = vpop.f32.mrf.mxu0
    %v1148 = vpop.f32.mrf.mxu0
    %v1149 = vadd.f32 0.0, %v1148
    %v1150 = vpop.f32.mrf.mxu0
    %1151 = vmatprep.mubr.bf16.mxu0 %v528
    %1152 = vmatmul.mubr.bf16.gmra.mxu0 %v527
    %v1153 = vpop.f32.mrf.mxu0
    %v1154 = vadd.f32 0.0, %v1153
    %v1155 = vpop.f32.mrf.mxu0
    %v1156 = vpop.f32.mrf.mxu0
    %v1157 = vadd.f32 0.0, %v1156
    %v1158 = vpop.f32.mrf.mxu0
    %1159 = vmatprep.mubr.bf16.mxu0 %v530
    %1160 = vmatmul.mubr.bf16.gmra.mxu0 %v529
    %v1161 = vpop.f32.mrf.mxu0
    %v1162 = vadd.f32 0.0, %v1161
    %v1163 = vpop.f32.mrf.mxu0
    %v1164 = vpop.f32.mrf.mxu0
    %v1165 = vadd.f32 0.0, %v1164
    %v1166 = vpop.f32.mrf.mxu0
    %1167 = vmatprep.mubr.bf16.mxu0 %v532
    %1168 = vmatmul.mubr.bf16.gmra.mxu0 %v531
    %v1169 = vpop.f32.mrf.mxu0
    %v1170 = vadd.f32 0.0, %v1169
    %v1171 = vpop.f32.mrf.mxu0
    %v1172 = vpop.f32.mrf.mxu0
    %v1173 = vadd.f32 0.0, %v1172
    %v1174 = vpop.f32.mrf.mxu0
    %1175 = vdwg.mxu0
    %v1176 = vpack.c.bf16 %v1053, %v1050
    %v1177 = vpack.c.bf16 %v1061, %v1058
    %v1178 = vpack.c.bf16 %v1069, %v1066
    %v1179 = vpack.c.bf16 %v1077, %v1074
    %v1180 = vpack.c.bf16 %v1085, %v1082
    %v1181 = vpack.c.bf16 %v1093, %v1090
    %v1182 = vpack.c.bf16 %v1101, %v1098
    %v1183 = vpack.c.bf16 %v1109, %v1106
    %v1184 = vpack.c.bf16 %v1117, %v1114
    %v1185 = vpack.c.bf16 %v1125, %v1122
    %v1186 = vpack.c.bf16 %v1133, %v1130
    %v1187 = vpack.c.bf16 %v1141, %v1138
    %v1188 = vpack.c.bf16 %v1149, %v1146
    %v1189 = vpack.c.bf16 %v1157, %v1154
    %v1190 = vpack.c.bf16 %v1165, %v1162
    %v1191 = vpack.c.bf16 %v1173, %v1170
    %vm1192 = vcmask 130048
    %v1194 = vsel %vm1192, %v1176, 0
    %v1197 = vsel %vm1192, %v1177, 0
    %v1200 = vsel %vm1192, %v1178, 0
    %v1203 = vsel %vm1192, %v1179, 0
    %v1206 = vsel %vm1192, %v1180, 0
    %v1209 = vsel %vm1192, %v1181, 0
    %v1212 = vsel %vm1192, %v1182, 0
    %v1215 = vsel %vm1192, %v1183, 0
    %v1218 = vsel %vm1192, %v1184, 0
    %v1221 = vsel %vm1192, %v1185, 0
    %v1224 = vsel %vm1192, %v1186, 0
    %v1227 = vsel %vm1192, %v1187, 0
    %v1230 = vsel %vm1192, %v1188, 0
    %v1233 = vsel %vm1192, %v1189, 0
    %v1236 = vsel %vm1192, %v1190, 0
    %v1239 = vsel %vm1192, %v1191, 0
    %1241 = vmatprep.subr.bf16.mxu0 0
    %1242 = vmatpush1.bf16.xpose.msra.mxu0 %v1215
    %1243 = vmatprep.subr.bf16.mxu0 0
    %1244 = vmatpush1.bf16.xpose.msra.mxu0 %v1212
    %1245 = vmatprep.subr.bf16.mxu0 0
    %1246 = vmatpush1.bf16.xpose.msra.mxu0 %v1209
    %1247 = vmatprep.subr.bf16.mxu0 0
    %1248 = vmatpush1.bf16.xpose.msra.mxu0 %v1206
    %1249 = vmatprep.subr.bf16.mxu0 0
    %1250 = vmatpush1.bf16.xpose.msra.mxu0 %v1203
    %1251 = vmatprep.subr.bf16.mxu0 0
    %1252 = vmatpush1.bf16.xpose.msra.mxu0 %v1200
    %1253 = vmatprep.subr.bf16.mxu0 0
    %1254 = vmatpush1.bf16.xpose.msra.mxu0 %v1197
    %1255 = vmatprep.subr.bf16.mxu0 0
    %1256 = vmatpush1.bf16.xpose.msra.mxu0 %v1194
    %1257 = vmatprep.subr.bf16.mxu0 0
    %1258 = vmatpush2.bf16.xpose.msra.mxu0 %v1239
    %1259 = vmatprep.subr.bf16.mxu0 0
    %1260 = vmatpush2.bf16.xpose.msra.mxu0 %v1236
    %1261 = vmatprep.subr.bf16.mxu0 0
    %1262 = vmatpush2.bf16.xpose.msra.mxu0 %v1233
    %1263 = vmatprep.subr.bf16.mxu0 0
    %1264 = vmatpush2.bf16.xpose.msra.mxu0 %v1230
    %1265 = vmatprep.subr.bf16.mxu0 0
    %1266 = vmatpush2.bf16.xpose.msra.mxu0 %v1227
    %1267 = vmatprep.subr.bf16.mxu0 0
    %1268 = vmatpush2.bf16.xpose.msra.mxu0 %v1224
    %1269 = vmatprep.subr.bf16.mxu0 0
    %1270 = vmatpush2.bf16.xpose.msra.mxu0 %v1221
    %1271 = vmatprep.subr.bf16.mxu0 0
    %1272 = vmatpush2.bf16.xpose.msra.mxu0 %v1218
    %1273 = vmatprep.mubr.bf16.mxu0 0
    %1274 = vmatmul.mubr.bf16.gmra.mxu0 %v1194
    %v1275 = vpop.f32.mrf.mxu0
    %v1276 = vadd.f32 0.0, %v1275
    %v1277 = vpop.f32.mrf.mxu0
    %v1278 = vadd.f32 0.0, %v1277
    %v1279 = vpop.f32.mrf.mxu0
    %v1280 = vadd.f32 0.0, %v1279
    %v1281 = vpop.f32.mrf.mxu0
    %v1282 = vadd.f32 0.0, %v1281
    %1283 = vmatprep.mubr.bf16.mxu0 0
    %1284 = vmatmul.mubr.bf16.gmra.mxu0 %v1197
    %v1285 = vpop.f32.mrf.mxu0
    %v1286 = vadd.f32 0.0, %v1285
    %v1287 = vpop.f32.mrf.mxu0
    %v1288 = vadd.f32 0.0, %v1287
    %v1289 = vpop.f32.mrf.mxu0
    %v1290 = vadd.f32 0.0, %v1289
    %v1291 = vpop.f32.mrf.mxu0
    %v1292 = vadd.f32 0.0, %v1291
    %1293 = vmatprep.mubr.bf16.mxu0 0
    %1294 = vmatmul.mubr.bf16.gmra.mxu0 %v1200
    %v1295 = vpop.f32.mrf.mxu0
    %v1296 = vadd.f32 0.0, %v1295
    %v1297 = vpop.f32.mrf.mxu0
    %v1298 = vadd.f32 0.0, %v1297
    %v1299 = vpop.f32.mrf.mxu0
    %v1300 = vadd.f32 0.0, %v1299
    %v1301 = vpop.f32.mrf.mxu0
    %v1302 = vadd.f32 0.0, %v1301
    %1303 = vmatprep.mubr.bf16.mxu0 0
    %1304 = vmatmul.mubr.bf16.gmra.mxu0 %v1203
    %v1305 = vpop.f32.mrf.mxu0
    %v1306 = vadd.f32 0.0, %v1305
    %v1307 = vpop.f32.mrf.mxu0
    %v1308 = vadd.f32 0.0, %v1307
    %v1309 = vpop.f32.mrf.mxu0
    %v1310 = vadd.f32 0.0, %v1309
    %v1311 = vpop.f32.mrf.mxu0
    %v1312 = vadd.f32 0.0, %v1311
    %1313 = vmatprep.mubr.bf16.mxu0 0
    %1314 = vmatmul.mubr.bf16.gmra.mxu0 %v1206
    %v1315 = vpop.f32.mrf.mxu0
    %v1316 = vadd.f32 0.0, %v1315
    %v1317 = vpop.f32.mrf.mxu0
    %v1318 = vadd.f32 0.0, %v1317
    %v1319 = vpop.f32.mrf.mxu0
    %v1320 = vadd.f32 0.0, %v1319
    %v1321 = vpop.f32.mrf.mxu0
    %v1322 = vadd.f32 0.0, %v1321
    %1323 = vmatprep.mubr.bf16.mxu0 0
    %1324 = vmatmul.mubr.bf16.gmra.mxu0 %v1209
    %v1325 = vpop.f32.mrf.mxu0
    %v1326 = vadd.f32 0.0, %v1325
    %v1327 = vpop.f32.mrf.mxu0
    %v1328 = vadd.f32 0.0, %v1327
    %v1329 = vpop.f32.mrf.mxu0
    %v1330 = vadd.f32 0.0, %v1329
    %v1331 = vpop.f32.mrf.mxu0
    %v1332 = vadd.f32 0.0, %v1331
    %1333 = vmatprep.mubr.bf16.mxu0 0
    %1334 = vmatmul.mubr.bf16.gmra.mxu0 %v1212
    %v1335 = vpop.f32.mrf.mxu0
    %v1336 = vadd.f32 0.0, %v1335
    %v1337 = vpop.f32.mrf.mxu0
    %v1338 = vadd.f32 0.0, %v1337
    %v1339 = vpop.f32.mrf.mxu0
    %v1340 = vadd.f32 0.0, %v1339
    %v1341 = vpop.f32.mrf.mxu0
    %v1342 = vadd.f32 0.0, %v1341
    %1343 = vmatprep.mubr.bf16.mxu0 0
    %1344 = vmatmul.mubr.bf16.gmra.mxu0 %v1215
    %v1345 = vpop.f32.mrf.mxu0
    %v1346 = vadd.f32 0.0, %v1345
    %v1347 = vpop.f32.mrf.mxu0
    %v1348 = vadd.f32 0.0, %v1347
    %v1349 = vpop.f32.mrf.mxu0
    %v1350 = vadd.f32 0.0, %v1349
    %v1351 = vpop.f32.mrf.mxu0
    %v1352 = vadd.f32 0.0, %v1351
    %1353 = vmatprep.mubr.bf16.mxu0 0
    %1354 = vmatmul.mubr.bf16.gmra.mxu0 %v1218
    %v1355 = vpop.f32.mrf.mxu0
    %v1356 = vadd.f32 0.0, %v1355
    %v1357 = vpop.f32.mrf.mxu0
    %v1358 = vadd.f32 0.0, %v1357
    %v1359 = vpop.f32.mrf.mxu0
    %v1360 = vadd.f32 0.0, %v1359
    %v1361 = vpop.f32.mrf.mxu0
    %v1362 = vadd.f32 0.0, %v1361
    %1363 = vmatprep.mubr.bf16.mxu0 0
    %1364 = vmatmul.mubr.bf16.gmra.mxu0 %v1221
    %v1365 = vpop.f32.mrf.mxu0
    %v1366 = vadd.f32 0.0, %v1365
    %v1367 = vpop.f32.mrf.mxu0
    %v1368 = vadd.f32 0.0, %v1367
    %v1369 = vpop.f32.mrf.mxu0
    %v1370 = vadd.f32 0.0, %v1369
    %v1371 = vpop.f32.mrf.mxu0
    %v1372 = vadd.f32 0.0, %v1371
    %1373 = vmatprep.mubr.bf16.mxu0 0
    %1374 = vmatmul.mubr.bf16.gmra.mxu0 %v1224
    %v1375 = vpop.f32.mrf.mxu0
    %v1376 = vadd.f32 0.0, %v1375
    %v1377 = vpop.f32.mrf.mxu0
    %v1378 = vadd.f32 0.0, %v1377
    %v1379 = vpop.f32.mrf.mxu0
    %v1380 = vadd.f32 0.0, %v1379
    %v1381 = vpop.f32.mrf.mxu0
    %v1382 = vadd.f32 0.0, %v1381
    %1383 = vmatprep.mubr.bf16.mxu0 0
    %1384 = vmatmul.mubr.bf16.gmra.mxu0 %v1227
    %v1385 = vpop.f32.mrf.mxu0
    %v1386 = vadd.f32 0.0, %v1385
    %v1387 = vpop.f32.mrf.mxu0
    %v1388 = vadd.f32 0.0, %v1387
    %v1389 = vpop.f32.mrf.mxu0
    %v1390 = vadd.f32 0.0, %v1389
    %v1391 = vpop.f32.mrf.mxu0
    %v1392 = vadd.f32 0.0, %v1391
    %1393 = vmatprep.mubr.bf16.mxu0 0
    %1394 = vmatmul.mubr.bf16.gmra.mxu0 %v1230
    %v1395 = vpop.f32.mrf.mxu0
    %v1396 = vadd.f32 0.0, %v1395
    %v1397 = vpop.f32.mrf.mxu0
    %v1398 = vadd.f32 0.0, %v1397
    %v1399 = vpop.f32.mrf.mxu0
    %v1400 = vadd.f32 0.0, %v1399
    %v1401 = vpop.f32.mrf.mxu0
    %v1402 = vadd.f32 0.0, %v1401
    %1403 = vmatprep.mubr.bf16.mxu0 0
    %1404 = vmatmul.mubr.bf16.gmra.mxu0 %v1233
    %v1405 = vpop.f32.mrf.mxu0
    %v1406 = vadd.f32 0.0, %v1405
    %v1407 = vpop.f32.mrf.mxu0
    %v1408 = vadd.f32 0.0, %v1407
    %v1409 = vpop.f32.mrf.mxu0
    %v1410 = vadd.f32 0.0, %v1409
    %v1411 = vpop.f32.mrf.mxu0
    %v1412 = vadd.f32 0.0, %v1411
    %1413 = vmatprep.mubr.bf16.mxu0 0
    %1414 = vmatmul.mubr.bf16.gmra.mxu0 %v1236
    %v1415 = vpop.f32.mrf.mxu0
    %v1416 = vadd.f32 0.0, %v1415
    %v1417 = vpop.f32.mrf.mxu0
    %v1418 = vadd.f32 0.0, %v1417
    %v1419 = vpop.f32.mrf.mxu0
    %v1420 = vadd.f32 0.0, %v1419
    %v1421 = vpop.f32.mrf.mxu0
    %v1422 = vadd.f32 0.0, %v1421
    %1423 = vmatprep.mubr.bf16.mxu0 0
    %1424 = vmatmul.mubr.bf16.gmra.mxu0 %v1239
    %v1425 = vpop.f32.mrf.mxu0
    %v1426 = vadd.f32 0.0, %v1425
    %v1427 = vpop.f32.mrf.mxu0
    %v1428 = vadd.f32 0.0, %v1427
    %v1429 = vpop.f32.mrf.mxu0
    %v1430 = vadd.f32 0.0, %v1429
    %v1431 = vpop.f32.mrf.mxu0
    %v1432 = vadd.f32 0.0, %v1431
    %1433 = vdwg.mxu0
    %v1434 = vmul.f32 %v1276, 0.5
    %v1435 = vmul.f32 %v1278, 0.5
    %v1436 = vmul.f32 %v1280, 0.5
    %v1437 = vmul.f32 %v1282, 0.5
    %v1438 = vmul.f32 %v1286, 0.5
    %v1439 = vmul.f32 %v1288, 0.5
    %v1440 = vmul.f32 %v1290, 0.5
    %v1441 = vmul.f32 %v1292, 0.5
    %v1442 = vmul.f32 %v1296, 0.5
    %v1443 = vmul.f32 %v1298, 0.5
    %v1444 = vmul.f32 %v1300, 0.5
    %v1445 = vmul.f32 %v1302, 0.5
    %v1446 = vmul.f32 %v1306, 0.5
    %v1447 = vmul.f32 %v1308, 0.5
    %v1448 = vmul.f32 %v1310, 0.5
    %v1449 = vmul.f32 %v1312, 0.5
    %v1450 = vmul.f32 %v1316, 0.5
    %v1451 = vmul.f32 %v1318, 0.5
    %v1452 = vmul.f32 %v1320, 0.5
    %v1453 = vmul.f32 %v1322, 0.5
    %v1454 = vmul.f32 %v1326, 0.5
    %v1455 = vmul.f32 %v1328, 0.5
    %v1456 = vmul.f32 %v1330, 0.5
    %v1457 = vmul.f32 %v1332, 0.5
    %v1458 = vmul.f32 %v1336, 0.5
    %v1459 = vmul.f32 %v1338, 0.5
    %v1460 = vmul.f32 %v1340, 0.5
    %v1461 = vmul.f32 %v1342, 0.5
    %v1462 = vmul.f32 %v1346, 0.5
    %v1463 = vmul.f32 %v1348, 0.5
    %v1464 = vmul.f32 %v1350, 0.5
    %v1465 = vmul.f32 %v1352, 0.5
    %v1466 = vmul.f32 %v1356, 0.5
    %v1467 = vmul.f32 %v1358, 0.5
    %v1468 = vmul.f32 %v1360, 0.5
    %v1469 = vmul.f32 %v1362, 0.5
    %v1470 = vmul.f32 %v1366, 0.5
    %v1471 = vmul.f32 %v1368, 0.5
    %v1472 = vmul.f32 %v1370, 0.5
    %v1473 = vmul.f32 %v1372, 0.5
    %v1474 = vmul.f32 %v1376, 0.5
    %v1475 = vmul.f32 %v1378, 0.5
    %v1476 = vmul.f32 %v1380, 0.5
    %v1477 = vmul.f32 %v1382, 0.5
    %v1478 = vmul.f32 %v1386, 0.5
    %v1479 = vmul.f32 %v1388, 0.5
    %v1480 = vmul.f32 %v1390, 0.5
    %v1481 = vmul.f32 %v1392, 0.5
    %v1482 = vmul.f32 %v1396, 0.5
    %v1483 = vmul.f32 %v1398, 0.5
    %v1484 = vmul.f32 %v1400, 0.5
    %v1485 = vmul.f32 %v1402, 0.5
    %v1486 = vmul.f32 %v1406, 0.5
    %v1487 = vmul.f32 %v1408, 0.5
    %v1488 = vmul.f32 %v1410, 0.5
    %v1489 = vmul.f32 %v1412, 0.5
    %v1490 = vmul.f32 %v1416, 0.5
    %v1491 = vmul.f32 %v1418, 0.5
    %v1492 = vmul.f32 %v1420, 0.5
    %v1493 = vmul.f32 %v1422, 0.5
    %v1494 = vmul.f32 %v1426, 0.5
    %v1495 = vmul.f32 %v1428, 0.5
    %v1496 = vmul.f32 %v1430, 0.5
    %v1497 = vmul.f32 %v1432, 0.5
    %v1498 = vtanh.pop %v1434
    %v1499 = vtanh.pop %v1435
    %v1500 = vtanh.pop %v1436
    %v1501 = vtanh.pop %v1437
    %v1502 = vtanh.pop %v1438
    %v1503 = vtanh.pop %v1439
    %v1504 = vtanh.pop %v1440
    %v1505 = vtanh.pop %v1441
    %v1506 = vtanh.pop %v1442
    %v1507 = vtanh.pop %v1443
    %v1508 = vtanh.pop %v1444
    %v1509 = vtanh.pop %v1445
    %v1510 = vtanh.pop %v1446
    %v1511 = vtanh.pop %v1447
    %v1512 = vtanh.pop %v1448
    %v1513 = vtanh.pop %v1449
    %v1514 = vtanh.pop %v1450
    %v1515 = vtanh.pop %v1451
    %v1516 = vtanh.pop %v1452
    %v1517 = vtanh.pop %v1453
    %v1518 = vtanh.pop %v1454
    %v1519 = vtanh.pop %v1455
    %v1520 = vtanh.pop %v1456
    %v1521 = vtanh.pop %v1457
    %v1522 = vtanh.pop %v1458
    %v1523 = vtanh.pop %v1459
    %v1524 = vtanh.pop %v1460
    %v1525 = vtanh.pop %v1461
    %v1526 = vtanh.pop %v1462
    %v1527 = vtanh.pop %v1463
    %v1528 = vtanh.pop %v1464
    %v1529 = vtanh.pop %v1465
    %v1530 = vtanh.pop %v1466
    %v1531 = vtanh.pop %v1467
    %v1532 = vtanh.pop %v1468
    %v1533 = vtanh.pop %v1469
    %v1534 = vtanh.pop %v1470
    %v1535 = vtanh.pop %v1471
    %v1536 = vtanh.pop %v1472
    %v1537 = vtanh.pop %v1473
    %v1538 = vtanh.pop %v1474
    %v1539 = vtanh.pop %v1475
    %v1540 = vtanh.pop %v1476
    %v1541 = vtanh.pop %v1477
    %v1542 = vtanh.pop %v1478
    %v1543 = vtanh.pop %v1479
    %v1544 = vtanh.pop %v1480
    %v1545 = vtanh.pop %v1481
    %v1546 = vtanh.pop %v1482
    %v1547 = vtanh.pop %v1483
    %v1548 = vtanh.pop %v1484
    %v1549 = vtanh.pop %v1485
    %v1550 = vtanh.pop %v1486
    %v1551 = vtanh.pop %v1487
    %v1552 = vtanh.pop %v1488
    %v1553 = vtanh.pop %v1489
    %v1554 = vtanh.pop %v1490
    %v1555 = vtanh.pop %v1491
    %v1556 = vtanh.pop %v1492
    %v1557 = vtanh.pop %v1493
    %v1558 = vtanh.pop %v1494
    %v1559 = vtanh.pop %v1495
    %v1560 = vtanh.pop %v1496
    %v1561 = vtanh.pop %v1497
    %v1562 = vadd.f32 %v1498, 1.0
    %v1563 = vadd.f32 %v1499, 1.0
    %v1564 = vadd.f32 %v1500, 1.0
    %v1565 = vadd.f32 %v1501, 1.0
    %v1566 = vadd.f32 %v1502, 1.0
    %v1567 = vadd.f32 %v1503, 1.0
    %v1568 = vadd.f32 %v1504, 1.0
    %v1569 = vadd.f32 %v1505, 1.0
    %v1570 = vadd.f32 %v1506, 1.0
    %v1571 = vadd.f32 %v1507, 1.0
    %v1572 = vadd.f32 %v1508, 1.0
    %v1573 = vadd.f32 %v1509, 1.0
    %v1574 = vadd.f32 %v1510, 1.0
    %v1575 = vadd.f32 %v1511, 1.0
    %v1576 = vadd.f32 %v1512, 1.0
    %v1577 = vadd.f32 %v1513, 1.0
    %v1578 = vadd.f32 %v1514, 1.0
    %v1579 = vadd.f32 %v1515, 1.0
    %v1580 = vadd.f32 %v1516, 1.0
    %v1581 = vadd.f32 %v1517, 1.0
    %v1582 = vadd.f32 %v1518, 1.0
    %v1583 = vadd.f32 %v1519, 1.0
    %v1584 = vadd.f32 %v1520, 1.0
    %v1585 = vadd.f32 %v1521, 1.0
    %v1586 = vadd.f32 %v1522, 1.0
    %v1587 = vadd.f32 %v1523, 1.0
    %v1588 = vadd.f32 %v1524, 1.0
    %v1589 = vadd.f32 %v1525, 1.0
    %v1590 = vadd.f32 %v1526, 1.0
    %v1591 = vadd.f32 %v1527, 1.0
    %v1592 = vadd.f32 %v1528, 1.0
    %v1593 = vadd.f32 %v1529, 1.0
    %v1594 = vadd.f32 %v1530, 1.0
    %v1595 = vadd.f32 %v1531, 1.0
    %v1596 = vadd.f32 %v1532, 1.0
    %v1597 = vadd.f32 %v1533, 1.0
    %v1598 = vadd.f32 %v1534, 1.0
    %v1599 = vadd.f32 %v1535, 1.0
    %v1600 = vadd.f32 %v1536, 1.0
    %v1601 = vadd.f32 %v1537, 1.0
    %v1602 = vadd.f32 %v1538, 1.0
    %v1603 = vadd.f32 %v1539, 1.0
    %v1604 = vadd.f32 %v1540, 1.0
    %v1605 = vadd.f32 %v1541, 1.0
    %v1606 = vadd.f32 %v1542, 1.0
    %v1607 = vadd.f32 %v1543, 1.0
    %v1608 = vadd.f32 %v1544, 1.0
    %v1609 = vadd.f32 %v1545, 1.0
    %v1610 = vadd.f32 %v1546, 1.0
    %v1611 = vadd.f32 %v1547, 1.0
    %v1612 = vadd.f32 %v1548, 1.0
    %v1613 = vadd.f32 %v1549, 1.0
    %v1614 = vadd.f32 %v1550, 1.0
    %v1615 = vadd.f32 %v1551, 1.0
    %v1616 = vadd.f32 %v1552, 1.0
    %v1617 = vadd.f32 %v1553, 1.0
    %v1618 = vadd.f32 %v1554, 1.0
    %v1619 = vadd.f32 %v1555, 1.0
    %v1620 = vadd.f32 %v1556, 1.0
    %v1621 = vadd.f32 %v1557, 1.0
    %v1622 = vadd.f32 %v1558, 1.0
    %v1623 = vadd.f32 %v1559, 1.0
    %v1624 = vadd.f32 %v1560, 1.0
    %v1625 = vadd.f32 %v1561, 1.0
    %v1626 = vmul.f32 %v1562, 0.5
    %v1627 = vmul.f32 %v1563, 0.5
    %v1628 = vmul.f32 %v1564, 0.5
    %v1629 = vmul.f32 %v1565, 0.5
    %v1630 = vmul.f32 %v1566, 0.5
    %v1631 = vmul.f32 %v1567, 0.5
    %v1632 = vmul.f32 %v1568, 0.5
    %v1633 = vmul.f32 %v1569, 0.5
    %v1634 = vmul.f32 %v1570, 0.5
    %v1635 = vmul.f32 %v1571, 0.5
    %v1636 = vmul.f32 %v1572, 0.5
    %v1637 = vmul.f32 %v1573, 0.5
    %v1638 = vmul.f32 %v1574, 0.5
    %v1639 = vmul.f32 %v1575, 0.5
    %v1640 = vmul.f32 %v1576, 0.5
    %v1641 = vmul.f32 %v1577, 0.5
    %v1642 = vmul.f32 %v1578, 0.5
    %v1643 = vmul.f32 %v1579, 0.5
    %v1644 = vmul.f32 %v1580, 0.5
    %v1645 = vmul.f32 %v1581, 0.5
    %v1646 = vmul.f32 %v1582, 0.5
    %v1647 = vmul.f32 %v1583, 0.5
    %v1648 = vmul.f32 %v1584, 0.5
    %v1649 = vmul.f32 %v1585, 0.5
    %v1650 = vmul.f32 %v1586, 0.5
    %v1651 = vmul.f32 %v1587, 0.5
    %v1652 = vmul.f32 %v1588, 0.5
    %v1653 = vmul.f32 %v1589, 0.5
    %v1654 = vmul.f32 %v1590, 0.5
    %v1655 = vmul.f32 %v1591, 0.5
    %v1656 = vmul.f32 %v1592, 0.5
    %v1657 = vmul.f32 %v1593, 0.5
    %v1658 = vmul.f32 %v1594, 0.5
    %v1659 = vmul.f32 %v1595, 0.5
    %v1660 = vmul.f32 %v1596, 0.5
    %v1661 = vmul.f32 %v1597, 0.5
    %v1662 = vmul.f32 %v1598, 0.5
    %v1663 = vmul.f32 %v1599, 0.5
    %v1664 = vmul.f32 %v1600, 0.5
    %v1665 = vmul.f32 %v1601, 0.5
    %v1666 = vmul.f32 %v1602, 0.5
    %v1667 = vmul.f32 %v1603, 0.5
    %v1668 = vmul.f32 %v1604, 0.5
    %v1669 = vmul.f32 %v1605, 0.5
    %v1670 = vmul.f32 %v1606, 0.5
    %v1671 = vmul.f32 %v1607, 0.5
    %v1672 = vmul.f32 %v1608, 0.5
    %v1673 = vmul.f32 %v1609, 0.5
    %v1674 = vmul.f32 %v1610, 0.5
    %v1675 = vmul.f32 %v1611, 0.5
    %v1676 = vmul.f32 %v1612, 0.5
    %v1677 = vmul.f32 %v1613, 0.5
    %v1678 = vmul.f32 %v1614, 0.5
    %v1679 = vmul.f32 %v1615, 0.5
    %v1680 = vmul.f32 %v1616, 0.5
    %v1681 = vmul.f32 %v1617, 0.5
    %v1682 = vmul.f32 %v1618, 0.5
    %v1683 = vmul.f32 %v1619, 0.5
    %v1684 = vmul.f32 %v1620, 0.5
    %v1685 = vmul.f32 %v1621, 0.5
    %v1686 = vmul.f32 %v1622, 0.5
    %v1687 = vmul.f32 %v1623, 0.5
    %v1688 = vmul.f32 %v1624, 0.5
    %v1689 = vmul.f32 %v1625, 0.5
    %v1690 = vpack.c.bf16 %v1628, %v1626
    %v1691 = vpack.c.bf16 %v1629, %v1627
    %v1692 = vpack.c.bf16 %v1632, %v1630
    %v1693 = vpack.c.bf16 %v1633, %v1631
    %v1694 = vpack.c.bf16 %v1636, %v1634
    %v1695 = vpack.c.bf16 %v1637, %v1635
    %v1696 = vpack.c.bf16 %v1640, %v1638
    %v1697 = vpack.c.bf16 %v1641, %v1639
    %v1698 = vpack.c.bf16 %v1644, %v1642
    %v1699 = vpack.c.bf16 %v1645, %v1643
    %v1700 = vpack.c.bf16 %v1648, %v1646
    %v1701 = vpack.c.bf16 %v1649, %v1647
    %v1702 = vpack.c.bf16 %v1652, %v1650
    %v1703 = vpack.c.bf16 %v1653, %v1651
    %v1704 = vpack.c.bf16 %v1656, %v1654
    %v1705 = vpack.c.bf16 %v1657, %v1655
    %v1706 = vpack.c.bf16 %v1660, %v1658
    %v1707 = vpack.c.bf16 %v1661, %v1659
    %v1708 = vpack.c.bf16 %v1664, %v1662
    %v1709 = vpack.c.bf16 %v1665, %v1663
    %v1710 = vpack.c.bf16 %v1668, %v1666
    %v1711 = vpack.c.bf16 %v1669, %v1667
    %v1712 = vpack.c.bf16 %v1672, %v1670
    %v1713 = vpack.c.bf16 %v1673, %v1671
    %v1714 = vpack.c.bf16 %v1676, %v1674
    %v1715 = vpack.c.bf16 %v1677, %v1675
    %v1716 = vpack.c.bf16 %v1680, %v1678
    %v1717 = vpack.c.bf16 %v1681, %v1679
    %v1718 = vpack.c.bf16 %v1684, %v1682
    %v1719 = vpack.c.bf16 %v1685, %v1683
    %v1720 = vpack.c.bf16 %v1688, %v1686
    %v1721 = vpack.c.bf16 %v1689, %v1687
    %v1754 = vunpack.c.l.b16 %v1690
    %v1755 = vunpack.c.l.b16 %v1691
    %v1756 = vunpack.c.h.b16 %v1690
    %v1757 = vunpack.c.h.b16 %v1691
    %v1758 = vunpack.c.l.b16 %v1692
    %v1759 = vunpack.c.l.b16 %v1693
    %v1760 = vunpack.c.h.b16 %v1692
    %v1761 = vunpack.c.h.b16 %v1693
    %v1762 = vunpack.c.l.b16 %v1694
    %v1763 = vunpack.c.l.b16 %v1695
    %v1764 = vunpack.c.h.b16 %v1694
    %v1765 = vunpack.c.h.b16 %v1695
    %v1766 = vunpack.c.l.b16 %v1696
    %v1767 = vunpack.c.l.b16 %v1697
    %v1768 = vunpack.c.h.b16 %v1696
    %v1769 = vunpack.c.h.b16 %v1697
    %v1770 = vunpack.c.l.b16 %v1698
    %v1771 = vunpack.c.l.b16 %v1699
    %v1772 = vunpack.c.h.b16 %v1698
    %v1773 = vunpack.c.h.b16 %v1699
    %v1774 = vunpack.c.l.b16 %v1700
    %v1775 = vunpack.c.l.b16 %v1701
    %v1776 = vunpack.c.h.b16 %v1700
    %v1777 = vunpack.c.h.b16 %v1701
    %v1778 = vunpack.c.l.b16 %v1702
    %v1779 = vunpack.c.l.b16 %v1703
    %v1780 = vunpack.c.h.b16 %v1702
    %v1781 = vunpack.c.h.b16 %v1703
    %v1782 = vunpack.c.l.b16 %v1704
    %v1783 = vunpack.c.l.b16 %v1705
    %v1784 = vunpack.c.h.b16 %v1704
    %v1785 = vunpack.c.h.b16 %v1705
    %v1786 = vunpack.c.l.b16 %v1706
    %v1787 = vunpack.c.l.b16 %v1707
    %v1788 = vunpack.c.h.b16 %v1706
    %v1789 = vunpack.c.h.b16 %v1707
    %v1790 = vunpack.c.l.b16 %v1708
    %v1791 = vunpack.c.l.b16 %v1709
    %v1792 = vunpack.c.h.b16 %v1708
    %v1793 = vunpack.c.h.b16 %v1709
    %v1794 = vunpack.c.l.b16 %v1710
    %v1795 = vunpack.c.l.b16 %v1711
    %v1796 = vunpack.c.h.b16 %v1710
    %v1797 = vunpack.c.h.b16 %v1711
    %v1798 = vunpack.c.l.b16 %v1712
    %v1799 = vunpack.c.l.b16 %v1713
    %v1800 = vunpack.c.h.b16 %v1712
    %v1801 = vunpack.c.h.b16 %v1713
    %v1802 = vunpack.c.l.b16 %v1714
    %v1803 = vunpack.c.l.b16 %v1715
    %v1804 = vunpack.c.h.b16 %v1714
    %v1805 = vunpack.c.h.b16 %v1715
    %v1806 = vunpack.c.l.b16 %v1716
    %v1807 = vunpack.c.l.b16 %v1717
    %v1808 = vunpack.c.h.b16 %v1716
    %v1809 = vunpack.c.h.b16 %v1717
    %v1810 = vunpack.c.l.b16 %v1718
    %v1811 = vunpack.c.l.b16 %v1719
    %v1812 = vunpack.c.h.b16 %v1718
    %v1813 = vunpack.c.h.b16 %v1719
    %v1814 = vunpack.c.l.b16 %v1720
    %v1815 = vunpack.c.l.b16 %v1721
    %v1816 = vunpack.c.h.b16 %v1720
    %v1817 = vunpack.c.h.b16 %v1721
    %v1818 = vpack.c.b16 %v1755, %v1754
    %v1819 = vpack.c.b16 %v1757, %v1756
    %v1820 = vpack.c.b16 %v1759, %v1758
    %v1821 = vpack.c.b16 %v1761, %v1760
    %v1822 = vpack.c.b16 %v1763, %v1762
    %v1823 = vpack.c.b16 %v1765, %v1764
    %v1824 = vpack.c.b16 %v1767, %v1766
    %v1825 = vpack.c.b16 %v1769, %v1768
    %v1826 = vpack.c.b16 %v1771, %v1770
    %v1827 = vpack.c.b16 %v1773, %v1772
    %v1828 = vpack.c.b16 %v1775, %v1774
    %v1829 = vpack.c.b16 %v1777, %v1776
    %v1830 = vpack.c.b16 %v1779, %v1778
    %v1831 = vpack.c.b16 %v1781, %v1780
    %v1832 = vpack.c.b16 %v1783, %v1782
    %v1833 = vpack.c.b16 %v1785, %v1784
    %v1834 = vpack.c.b16 %v1787, %v1786
    %v1835 = vpack.c.b16 %v1789, %v1788
    %v1836 = vpack.c.b16 %v1791, %v1790
    %v1837 = vpack.c.b16 %v1793, %v1792
    %v1838 = vpack.c.b16 %v1795, %v1794
    %v1839 = vpack.c.b16 %v1797, %v1796
    %v1840 = vpack.c.b16 %v1799, %v1798
    %v1841 = vpack.c.b16 %v1801, %v1800
    %v1842 = vpack.c.b16 %v1803, %v1802
    %v1843 = vpack.c.b16 %v1805, %v1804
    %v1844 = vpack.c.b16 %v1807, %v1806
    %v1845 = vpack.c.b16 %v1809, %v1808
    %v1846 = vpack.c.b16 %v1811, %v1810
    %v1847 = vpack.c.b16 %v1813, %v1812
    %v1848 = vpack.c.b16 %v1815, %v1814
    %v1849 = vpack.c.b16 %v1817, %v1816
    %1882 = vst [vmem:[#allocation2] sm:$0xff] %v1818
    %1883 = vst [vmem:[#allocation2 + $0x8] sm:$0xff] %v1819
    %1884 = vst [vmem:[#allocation2 + $0x10] sm:$0xff] %v1820
    %1885 = vst [vmem:[#allocation2 + $0x18] sm:$0xff] %v1821
    %1886 = vst [vmem:[#allocation2 + $0x20] sm:$0xff] %v1822
    %1887 = vst [vmem:[#allocation2 + $0x28] sm:$0xff] %v1823
    %1888 = vst [vmem:[#allocation2 + $0x30] sm:$0xff] %v1824
    %1889 = vst [vmem:[#allocation2 + $0x38] sm:$0xff] %v1825
    %1890 = vst [vmem:[#allocation2 + $0x40] sm:$0xff] %v1826
    %1891 = vst [vmem:[#allocation2 + $0x48] sm:$0xff] %v1827
    %1892 = vst [vmem:[#allocation2 + $0x50] sm:$0xff] %v1828
    %1893 = vst [vmem:[#allocation2 + $0x58] sm:$0xff] %v1829
    %1894 = vst [vmem:[#allocation2 + $0x60] sm:$0xff] %v1830
    %1895 = vst [vmem:[#allocation2 + $0x68] sm:$0xff] %v1831
    %1896 = vst [vmem:[#allocation2 + $0x70] sm:$0xff] %v1832
    %1897 = vst [vmem:[#allocation2 + $0x78] sm:$0xff] %v1833
    %1898 = vst [vmem:[#allocation2 + $0x80] sm:$0xff] %v1834
    %1899 = vst [vmem:[#allocation2 + $0x88] sm:$0xff] %v1835
    %1900 = vst [vmem:[#allocation2 + $0x90] sm:$0xff] %v1836
    %1901 = vst [vmem:[#allocation2 + $0x98] sm:$0xff] %v1837
    %1902 = vst [vmem:[#allocation2 + $0xa0] sm:$0xff] %v1838
    %1903 = vst [vmem:[#allocation2 + $0xa8] sm:$0xff] %v1839
    %1904 = vst [vmem:[#allocation2 + $0xb0] sm:$0xff] %v1840
    %1905 = vst [vmem:[#allocation2 + $0xb8] sm:$0xff] %v1841
    %1906 = vst [vmem:[#allocation2 + $0xc0] sm:$0xff] %v1842
    %1907 = vst [vmem:[#allocation2 + $0xc8] sm:$0xff] %v1843
    %1908 = vst [vmem:[#allocation2 + $0xd0] sm:$0xff] %v1844
    %1909 = vst [vmem:[#allocation2 + $0xd8] sm:$0xff] %v1845
    %1910 = vst [vmem:[#allocation2 + $0xe0] sm:$0xff] %v1846
    %1911 = vst [vmem:[#allocation2 + $0xe8] sm:$0xff] %v1847
    %1912 = vst [vmem:[#allocation2 + $0xf0] sm:$0xff] %v1848
    %1913 = vst [vmem:[#allocation2 + $0xf8] sm:$0xff] %v1849
    // Predicated region
    $region18: #{gae_forward.1} parent=1 // pred_check
      _
    $region19: #{gae_forward.1} parent=1 // pred_check_branch
      %1915 = sbr.rel (0) target = $region21
    $region20: #{gae_forward.1} parent=1 // pred_region
      %s1917 = ssub.s32 4096, 4096
      %1918 = vsyncadd [#allocation3], %s1917
      %s1919 = sshll.u32 [#allocation2], 4
      %s1920 = int_to_ptr.vmem [resolvable:$true] %s1919
      %1925 = dma.vmem_to_hbm [thread:$0]  %s1920, 4096, %s4, [#allocation3], 128, 128, 8
    $region21: #{gae_forward.1} parent=1 // pred_fallthru
      _
    // Predicated region
    $region22: #{gae_forward.1} parent=1 // pred_check
      _
    $region23: #{gae_forward.1} parent=1 // pred_check_branch
      %1927 = sbr.rel (0) target = $region25
    $region24: #{gae_forward.1} parent=1 // pred_region
      %1928 = dma.done [#allocation3], 4096
    $region25: #{gae_forward.1} parent=1 // pred_fallthru
      _
    %1929 = vsyncpa [#allocation3], 1

</llo_original>
